<compile_context>
chip_gen: v6e
topology: v6e:2x2x1
jax: 0.10.0
libtpu: 0.0.40
codegen_flags: <defaults>
</compile_context>

<pallas_src>
import functools
import math

import jax
import jax.numpy as jnp
from jax.experimental import pallas as pl

D_MODEL   = 32
NUM_HEADS = 4
SEQ_LEN   = 16
BATCH     = 2
D_K       = D_MODEL // NUM_HEADS


# ============================================================
# Fused Pallas kernel (single program, everything VMEM-resident)
# ============================================================

def _mha_kernel(q_ref, k_ref, v_ref, *rest,
                batch, seq_q, seq_kv, num_heads, d_k, use_mask):
    """Fused multi-head attention forward.

    Refs (whole-array VMEM blocks, single program):
      q_ref : (B*Sq,  D) f32   flattened query activations
      k_ref : (B*Skv, D) f32   flattened key activations
      v_ref : (B*Skv, D) f32   flattened value activations
      [bias_ref] : (B, Sq, Skv) f32 additive mask bias (0 = attend, -1e4 = masked)
      w_ref : (D, 4*D) bf16    [Wq | Wk | Wv | Wo] lane-dense weight blob
      b_ref : (1, 4*D) f32     [bq | bk | bv | bo] lane-dense bias blob
      o_ref : (B*Sq, D) f32
    """
    if use_mask:
        bias_ref, w_ref, b_ref, o_ref = rest
    else:
        w_ref, b_ref, o_ref = rest
        bias_ref = None

    d_model = num_heads * d_k

    # ---- Q/K/V projections: three lane-dense (B*S, D) @ (D, D) matmuls ----
    xq = q_ref[...].astype(jnp.bfloat16)          # (B*Sq,  D)
    xk = k_ref[...].astype(jnp.bfloat16)          # (B*Skv, D)
    xv = v_ref[...].astype(jnp.bfloat16)          # (B*Skv, D)

    w = w_ref[...]                                # (D, 4D) bf16, one load
    b = b_ref[...]                                # (1, 4D) f32,  one load

    qp = jnp.dot(xq, w[:, 0 * d_model:1 * d_model],
                 preferred_element_type=jnp.float32) + b[:, 0 * d_model:1 * d_model]
    kp = jnp.dot(xk, w[:, 1 * d_model:2 * d_model],
                 preferred_element_type=jnp.float32) + b[:, 1 * d_model:2 * d_model]
    vp = jnp.dot(xv, w[:, 2 * d_model:3 * d_model],
                 preferred_element_type=jnp.float32) + b[:, 2 * d_model:3 * d_model]

    # Sublane-aligned split of the batch dim (32 -> 2 x 16 rows, no relayout).
    qp = qp.reshape(batch, seq_q, d_model)        # lanes ordered (head, d_k)
    kp = kp.reshape(batch, seq_kv, d_model)
    vp = vp.reshape(batch, seq_kv, d_model)

    inv_scale = 1.0 / math.sqrt(d_k)
    bias = bias_ref[...] if use_mask else None    # (B, Sq, Skv), loaded once

    # ---- per-head attention (H=4, static lane slices, B folded as the
    #      batch dim of each 3-D dot_general) ----
    ctx_heads = []
    for h in range(num_heads):
        lo, hi = h * d_k, (h + 1) * d_k
        qh = qp[:, :, lo:hi].astype(jnp.bfloat16)     # (B, Sq,  dk)
        kh = kp[:, :, lo:hi].astype(jnp.bfloat16)     # (B, Skv, dk)
        vh = vp[:, :, lo:hi].astype(jnp.bfloat16)     # (B, Skv, dk)

        s = jnp.einsum('bqd,bkd->bqk', qh, kh,
                       preferred_element_type=jnp.float32) * inv_scale
        if use_mask:
            s = s + bias                              # additive mask bias

        # Numerically stable softmax in f32; reciprocal goes to the EUP slot.
        s = s - jnp.max(s, axis=-1, keepdims=True)
        p = jnp.exp(s)
        p = p * pl.reciprocal(jnp.sum(p, axis=-1, keepdims=True), approx=True)

        ctx_heads.append(
            jnp.einsum('bqk,bkd->bqd', p.astype(jnp.bfloat16), vh,
                       preferred_element_type=jnp.float32))   # (B, Sq, dk)

    # ---- output projection: one (B*Sq, D) @ (D, D) matmul ----
    ctx = jnp.concatenate(ctx_heads, axis=-1)         # (B, Sq, D), (head, dk) lane order
    ctx = ctx.reshape(batch * seq_q, d_model).astype(jnp.bfloat16)
    out = jnp.dot(ctx, w[:, 3 * d_model:4 * d_model],
                  preferred_element_type=jnp.float32) + b[:, 3 * d_model:4 * d_model]
    o_ref[...] = out


# ============================================================
# Wrapper
# ============================================================

def multi_head_attention(q, k, v, params, mask=None):
    """Eval-mode forward of the PyTorch MultiHeadAttention module.

    `params` uses math convention y = x @ W + b with W of shape (d_in, d_out)
    (i.e. the transpose of torch.nn.Linear.weight).
    """
    batch, s_q, d_model = q.shape
    s_kv = k.shape[1]
    num_heads = NUM_HEADS
    d_k = d_model // num_heads

    # ---- trace-time (free) lane-dense repacking of the parameters ----
    w_blob = jnp.concatenate(
        [params['wq'], params['wk'], params['wv'], params['wo']],
        axis=1).astype(jnp.bfloat16)                              # (D, 4D) = (32, 128)
    b_blob = jnp.concatenate(
        [params['bq'], params['bk'], params['bv'], params['bo']]
    ).reshape(1, 4 * d_model).astype(jnp.float32)                 # (1, 4D) = (1, 128)

    # Flatten activations wrapper-side (free reshape).
    q2 = q.reshape(batch * s_q, d_model)
    k2 = k.reshape(batch * s_kv, d_model)
    v2 = v.reshape(batch * s_kv, d_model)

    use_mask = mask is not None
    args = [q2, k2, v2]
    if use_mask:
        # Additive bias: 0 where attend, -1e4 where masked (matches masked_fill).
        args.append(jnp.where(mask != 0, 0.0, -10000.0).astype(jnp.float32))
    args += [w_blob, b_blob]

    kern = functools.partial(_mha_kernel, batch=batch, seq_q=s_q, seq_kv=s_kv,
                             num_heads=num_heads, d_k=d_k, use_mask=use_mask)

    # Whole problem (<100 KB) fits in VMEM on v5e/v6e/v7x -> single program,
    # whole-array blocks (default BlockSpecs), no grid.
    out = pl.pallas_call(
        kern,
        out_shape=jax.ShapeDtypeStruct((batch * s_q, d_model), jnp.float32),
    )(*args)
    return out.reshape(batch, s_q, d_model)


# ============================================================
# Pure-JAX reference (mirrors the PyTorch forward exactly)
# ============================================================

def _mha_reference(q, k, v, params, mask=None):
    batch, s_q, d_model = q.shape
    h, d_k = NUM_HEADS, d_model // NUM_HEADS
    qp = (q @ params['wq'] + params['bq']).reshape(batch, s_q, h, d_k).transpose(0, 2, 1, 3)
    kp = (k @ params['wk'] + params['bk']).reshape(batch, -1, h, d_k).transpose(0, 2, 1, 3)
    vp = (v @ params['wv'] + params['bv']).reshape(batch, -1, h, d_k).transpose(0, 2, 1, 3)
    s = jnp.einsum('bhqd,bhkd->bhqk', qp, kp) / math.sqrt(d_k)
    if mask is not None:
        s = jnp.where(mask[:, None].astype(bool), s, -10000.0)
    p = jax.nn.softmax(s, axis=-1)
    ctx = jnp.einsum('bhqk,bhkd->bhqd', p, vp).transpose(0, 2, 1, 3).reshape(batch, s_q, d_model)
    return ctx @ params['wo'] + params['bo']


def init_params(key):
    ks = jax.random.split(key, 8)
    scale = 1.0 / math.sqrt(D_MODEL)

    def lin(k):
        return jax.random.normal(k, (D_MODEL, D_MODEL), jnp.float32) * scale

    return {
        'wq': lin(ks[0]), 'bq': jax.random.normal(ks[1], (D_MODEL,), jnp.float32) * 0.02,
        'wk': lin(ks[2]), 'bk': jnp.zeros((D_MODEL,), jnp.float32),
        'wv': lin(ks[3]), 'bv': jax.random.normal(ks[4], (D_MODEL,), jnp.float32) * 0.02,
        'wo': lin(ks[5]), 'bo': jax.random.normal(ks[6], (D_MODEL,), jnp.float32) * 0.02,
    }


if __name__ == "__main__":
    root = jax.random.PRNGKey(0)
    k_p, k_q, k_k, k_v = jax.random.split(root, 4)
    params = init_params(k_p)

    q = jax.random.normal(k_q, (BATCH, SEQ_LEN, D_MODEL), jnp.float32)
    k = jax.random.normal(k_k, (BATCH, SEQ_LEN, D_MODEL), jnp.float32)
    v = jax.random.normal(k_v, (BATCH, SEQ_LEN, D_MODEL), jnp.float32)
    # causal mask: every query row keeps at least one key
    causal = jnp.tril(jnp.ones((SEQ_LEN, SEQ_LEN), jnp.float32))
    mask = jnp.broadcast_to(causal, (BATCH, SEQ_LEN, SEQ_LEN))

    out_masked = jax.block_until_ready(multi_head_attention(q, k, v, params, mask))
    out_nomask = jax.block_until_ready(multi_head_attention(q, k, v, params, None))

    ref_masked = _mha_reference(q, k, v, params, mask)
    ref_nomask = _mha_reference(q, k, v, params, None)

    assert out_masked.shape == (BATCH, SEQ_LEN, D_MODEL), out_masked.shape
    assert bool(jnp.all(jnp.isfinite(out_masked)))
    assert bool(jnp.allclose(out_masked, ref_masked, atol=5e-2, rtol=5e-2)), \
        float(jnp.max(jnp.abs(out_masked - ref_masked)))
    assert bool(jnp.allclose(out_nomask, ref_nomask, atol=5e-2, rtol=5e-2)), \
        float(jnp.max(jnp.abs(out_nomask - ref_nomask)))
    print("KERNEL_OK")
</pallas_src>

<mosaic_0001>
module attributes {stable_mosaic.version = 11 : i64} {
  func.func @_mha_kernel(%arg0: memref<32x32xf32, #tpu.memory_space<vmem>>, %arg1: memref<32x32xf32, #tpu.memory_space<vmem>>, %arg2: memref<32x32xf32, #tpu.memory_space<vmem>>, %arg3: memref<2x16x16xf32, #tpu.memory_space<vmem>>, %arg4: memref<32x128xbf16, #tpu.memory_space<vmem>>, %arg5: memref<1x128xf32, #tpu.memory_space<vmem>>, %arg6: memref<32x32xf32, #tpu.memory_space<vmem>>) attributes {dimension_semantics = [], scalar_prefetch = 0 : i64, scratch_operands = 0 : i64, tpu.core_type = #tpu.core_type<tc>} {
    %c0 = arith.constant 0 : index
    %c0_0 = arith.constant 0 : index
    %0 = vector.load %arg0[%c0, %c0_0] : memref<32x32xf32, #tpu.memory_space<vmem>>, vector<32x32xf32>
    %1 = arith.truncf %0 : vector<32x32xf32> to vector<32x32xbf16>
    %c0_1 = arith.constant 0 : index
    %c0_2 = arith.constant 0 : index
    %2 = vector.load %arg1[%c0_1, %c0_2] : memref<32x32xf32, #tpu.memory_space<vmem>>, vector<32x32xf32>
    %3 = arith.truncf %2 : vector<32x32xf32> to vector<32x32xbf16>
    %c0_3 = arith.constant 0 : index
    %c0_4 = arith.constant 0 : index
    %4 = vector.load %arg2[%c0_3, %c0_4] : memref<32x32xf32, #tpu.memory_space<vmem>>, vector<32x32xf32>
    %5 = arith.truncf %4 : vector<32x32xf32> to vector<32x32xbf16>
    %c0_5 = arith.constant 0 : index
    %c0_6 = arith.constant 0 : index
    %6 = vector.load %arg4[%c0_5, %c0_6] : memref<32x128xbf16, #tpu.memory_space<vmem>>, vector<32x128xbf16>
    %c0_7 = arith.constant 0 : index
    %c0_8 = arith.constant 0 : index
    %7 = vector.load %arg5[%c0_7, %c0_8] : memref<1x128xf32, #tpu.memory_space<vmem>>, vector<1x128xf32>
    %8 = vector.extract_strided_slice %6 {offsets = [0, 0], sizes = [32, 32], strides = [1, 1]} : vector<32x128xbf16> to vector<32x32xbf16>
    %cst = arith.constant dense<0.000000e+00> : vector<32x32xf32>
    %9 = tpu.matmul %1, %8, %cst {dimension_numbers = #tpu.dot_dimension_numbers<[1], [0], [0], [1], [0, 0, 1, 1], [], []>} : vector<32x32xbf16>, vector<32x32xbf16>, vector<32x32xf32> -> vector<32x32xf32>
    %10 = vector.extract_strided_slice %7 {offsets = [0, 0], sizes = [1, 32], strides = [1, 1]} : vector<1x128xf32> to vector<1x32xf32>
    %11 = vector.broadcast %10 : vector<1x32xf32> to vector<32x32xf32>
    %12 = arith.addf %9, %11 : vector<32x32xf32>
    %13 = vector.extract_strided_slice %6 {offsets = [0, 32], sizes = [32, 32], strides = [1, 1]} : vector<32x128xbf16> to vector<32x32xbf16>
    %cst_9 = arith.constant dense<0.000000e+00> : vector<32x32xf32>
    %14 = tpu.matmul %3, %13, %cst_9 {dimension_numbers = #tpu.dot_dimension_numbers<[1], [0], [0], [1], [0, 0, 1, 1], [], []>} : vector<32x32xbf16>, vector<32x32xbf16>, vector<32x32xf32> -> vector<32x32xf32>
    %15 = vector.extract_strided_slice %7 {offsets = [0, 32], sizes = [1, 32], strides = [1, 1]} : vector<1x128xf32> to vector<1x32xf32>
    %16 = vector.broadcast %15 : vector<1x32xf32> to vector<32x32xf32>
    %17 = arith.addf %14, %16 : vector<32x32xf32>
    %18 = vector.extract_strided_slice %6 {offsets = [0, 64], sizes = [32, 32], strides = [1, 1]} : vector<32x128xbf16> to vector<32x32xbf16>
    %cst_10 = arith.constant dense<0.000000e+00> : vector<32x32xf32>
    %19 = tpu.matmul %5, %18, %cst_10 {dimension_numbers = #tpu.dot_dimension_numbers<[1], [0], [0], [1], [0, 0, 1, 1], [], []>} : vector<32x32xbf16>, vector<32x32xbf16>, vector<32x32xf32> -> vector<32x32xf32>
    %20 = vector.extract_strided_slice %7 {offsets = [0, 64], sizes = [1, 32], strides = [1, 1]} : vector<1x128xf32> to vector<1x32xf32>
    %21 = vector.broadcast %20 : vector<1x32xf32> to vector<32x32xf32>
    %22 = arith.addf %19, %21 : vector<32x32xf32>
    %23 = vector.shape_cast %12 : vector<32x32xf32> to vector<2x16x32xf32>
    %24 = vector.shape_cast %17 : vector<32x32xf32> to vector<2x16x32xf32>
    %25 = vector.shape_cast %22 : vector<32x32xf32> to vector<2x16x32xf32>
    %c0_11 = arith.constant 0 : index
    %c0_12 = arith.constant 0 : index
    %c0_13 = arith.constant 0 : index
    %26 = vector.load %arg3[%c0_11, %c0_12, %c0_13] : memref<2x16x16xf32, #tpu.memory_space<vmem>>, vector<2x16x16xf32>
    %27 = vector.extract_strided_slice %23 {offsets = [0, 0, 0], sizes = [2, 16, 8], strides = [1, 1, 1]} : vector<2x16x32xf32> to vector<2x16x8xf32>
    %28 = arith.truncf %27 : vector<2x16x8xf32> to vector<2x16x8xbf16>
    %29 = vector.extract_strided_slice %24 {offsets = [0, 0, 0], sizes = [2, 16, 8], strides = [1, 1, 1]} : vector<2x16x32xf32> to vector<2x16x8xf32>
    %30 = arith.truncf %29 : vector<2x16x8xf32> to vector<2x16x8xbf16>
    %31 = vector.extract_strided_slice %25 {offsets = [0, 0, 0], sizes = [2, 16, 8], strides = [1, 1, 1]} : vector<2x16x32xf32> to vector<2x16x8xf32>
    %32 = arith.truncf %31 : vector<2x16x8xf32> to vector<2x16x8xbf16>
    "tpu.trace_start"() <{level = 10 : i32, message = "bqd,bkd->bqk"}> : () -> ()
    %cst_14 = arith.constant dense<0.000000e+00> : vector<2x16x16xf32>
    %33 = tpu.matmul %28, %30, %cst_14 {dimension_numbers = #tpu.dot_dimension_numbers<[2], [2], [1], [1], [0, 0, 0, 1, 1, 1], [0], [0]>} : vector<2x16x8xbf16>, vector<2x16x8xbf16>, vector<2x16x16xf32> -> vector<2x16x16xf32>
    "tpu.trace_stop"() : () -> ()
    %cst_15 = arith.constant 0.353553385 : f32
    %34 = vector.broadcast %cst_15 : f32 to vector<2x16x16xf32>
    %35 = arith.mulf %33, %34 : vector<2x16x16xf32>
    %36 = arith.addf %35, %26 : vector<2x16x16xf32>
    %cst_16 = arith.constant dense<0xFF800000> : vector<2x16xf32>
    %37 = vector.multi_reduction <maximumf>, %36, %cst_16 [2] : vector<2x16x16xf32> to vector<2x16xf32>
    %38 = vector.shape_cast %37 : vector<2x16xf32> to vector<2x16x1xf32>
    %39 = vector.broadcast %38 : vector<2x16x1xf32> to vector<2x16x16xf32>
    %40 = arith.subf %36, %39 : vector<2x16x16xf32>
    %41 = math.exp %40 : vector<2x16x16xf32>
    %cst_17 = arith.constant dense<0.000000e+00> : vector<2x16xf32>
    %42 = vector.multi_reduction <add>, %41, %cst_17 [2] : vector<2x16x16xf32> to vector<2x16xf32>
    %43 = vector.shape_cast %42 : vector<2x16xf32> to vector<2x16x1xf32>
    %44 = tpu.reciprocal %43 {approx = true} : vector<2x16x1xf32> -> vector<2x16x1xf32>
    %45 = vector.broadcast %44 : vector<2x16x1xf32> to vector<2x16x16xf32>
    %46 = arith.mulf %41, %45 : vector<2x16x16xf32>
    %47 = arith.truncf %46 : vector<2x16x16xf32> to vector<2x16x16xbf16>
    "tpu.trace_start"() <{level = 10 : i32, message = "bqk,bkd->bqd"}> : () -> ()
    %cst_18 = arith.constant dense<0.000000e+00> : vector<2x16x8xf32>
    %48 = tpu.matmul %47, %32, %cst_18 {dimension_numbers = #tpu.dot_dimension_numbers<[2], [1], [1], [2], [0, 0, 0, 1, 1, 2], [0], [0]>} : vector<2x16x16xbf16>, vector<2x16x8xbf16>, vector<2x16x8xf32> -> vector<2x16x8xf32>
    "tpu.trace_stop"() : () -> ()
    %49 = vector.extract_strided_slice %23 {offsets = [0, 0, 8], sizes = [2, 16, 8], strides = [1, 1, 1]} : vector<2x16x32xf32> to vector<2x16x8xf32>
    %50 = arith.truncf %49 : vector<2x16x8xf32> to vector<2x16x8xbf16>
    %51 = vector.extract_strided_slice %24 {offsets = [0, 0, 8], sizes = [2, 16, 8], strides = [1, 1, 1]} : vector<2x16x32xf32> to vector<2x16x8xf32>
    %52 = arith.truncf %51 : vector<2x16x8xf32> to vector<2x16x8xbf16>
    %53 = vector.extract_strided_slice %25 {offsets = [0, 0, 8], sizes = [2, 16, 8], strides = [1, 1, 1]} : vector<2x16x32xf32> to vector<2x16x8xf32>
    %54 = arith.truncf %53 : vector<2x16x8xf32> to vector<2x16x8xbf16>
    "tpu.trace_start"() <{level = 10 : i32, message = "bqd,bkd->bqk"}> : () -> ()
    %cst_19 = arith.constant dense<0.000000e+00> : vector<2x16x16xf32>
    %55 = tpu.matmul %50, %52, %cst_19 {dimension_numbers = #tpu.dot_dimension_numbers<[2], [2], [1], [1], [0, 0, 0, 1, 1, 1], [0], [0]>} : vector<2x16x8xbf16>, vector<2x16x8xbf16>, vector<2x16x16xf32> -> vector<2x16x16xf32>
    "tpu.trace_stop"() : () -> ()
    %cst_20 = arith.constant 0.353553385 : f32
    %56 = vector.broadcast %cst_20 : f32 to vector<2x16x16xf32>
    %57 = arith.mulf %55, %56 : vector<2x16x16xf32>
    %58 = arith.addf %57, %26 : vector<2x16x16xf32>
    %cst_21 = arith.constant dense<0xFF800000> : vector<2x16xf32>
    %59 = vector.multi_reduction <maximumf>, %58, %cst_21 [2] : vector<2x16x16xf32> to vector<2x16xf32>
    %60 = vector.shape_cast %59 : vector<2x16xf32> to vector<2x16x1xf32>
    %61 = vector.broadcast %60 : vector<2x16x1xf32> to vector<2x16x16xf32>
    %62 = arith.subf %58, %61 : vector<2x16x16xf32>
    %63 = math.exp %62 : vector<2x16x16xf32>
    %cst_22 = arith.constant dense<0.000000e+00> : vector<2x16xf32>
    %64 = vector.multi_reduction <add>, %63, %cst_22 [2] : vector<2x16x16xf32> to vector<2x16xf32>
    %65 = vector.shape_cast %64 : vector<2x16xf32> to vector<2x16x1xf32>
    %66 = tpu.reciprocal %65 {approx = true} : vector<2x16x1xf32> -> vector<2x16x1xf32>
    %67 = vector.broadcast %66 : vector<2x16x1xf32> to vector<2x16x16xf32>
    %68 = arith.mulf %63, %67 : vector<2x16x16xf32>
    %69 = arith.truncf %68 : vector<2x16x16xf32> to vector<2x16x16xbf16>
    "tpu.trace_start"() <{level = 10 : i32, message = "bqk,bkd->bqd"}> : () -> ()
    %cst_23 = arith.constant dense<0.000000e+00> : vector<2x16x8xf32>
    %70 = tpu.matmul %69, %54, %cst_23 {dimension_numbers = #tpu.dot_dimension_numbers<[2], [1], [1], [2], [0, 0, 0, 1, 1, 2], [0], [0]>} : vector<2x16x16xbf16>, vector<2x16x8xbf16>, vector<2x16x8xf32> -> vector<2x16x8xf32>
    "tpu.trace_stop"() : () -> ()
    %71 = vector.extract_strided_slice %23 {offsets = [0, 0, 16], sizes = [2, 16, 8], strides = [1, 1, 1]} : vector<2x16x32xf32> to vector<2x16x8xf32>
    %72 = arith.truncf %71 : vector<2x16x8xf32> to vector<2x16x8xbf16>
    %73 = vector.extract_strided_slice %24 {offsets = [0, 0, 16], sizes = [2, 16, 8], strides = [1, 1, 1]} : vector<2x16x32xf32> to vector<2x16x8xf32>
    %74 = arith.truncf %73 : vector<2x16x8xf32> to vector<2x16x8xbf16>
    %75 = vector.extract_strided_slice %25 {offsets = [0, 0, 16], sizes = [2, 16, 8], strides = [1, 1, 1]} : vector<2x16x32xf32> to vector<2x16x8xf32>
    %76 = arith.truncf %75 : vector<2x16x8xf32> to vector<2x16x8xbf16>
    "tpu.trace_start"() <{level = 10 : i32, message = "bqd,bkd->bqk"}> : () -> ()
    %cst_24 = arith.constant dense<0.000000e+00> : vector<2x16x16xf32>
    %77 = tpu.matmul %72, %74, %cst_24 {dimension_numbers = #tpu.dot_dimension_numbers<[2], [2], [1], [1], [0, 0, 0, 1, 1, 1], [0], [0]>} : vector<2x16x8xbf16>, vector<2x16x8xbf16>, vector<2x16x16xf32> -> vector<2x16x16xf32>
    "tpu.trace_stop"() : () -> ()
    %cst_25 = arith.constant 0.353553385 : f32
    %78 = vector.broadcast %cst_25 : f32 to vector<2x16x16xf32>
    %79 = arith.mulf %77, %78 : vector<2x16x16xf32>
    %80 = arith.addf %79, %26 : vector<2x16x16xf32>
    %cst_26 = arith.constant dense<0xFF800000> : vector<2x16xf32>
    %81 = vector.multi_reduction <maximumf>, %80, %cst_26 [2] : vector<2x16x16xf32> to vector<2x16xf32>
    %82 = vector.shape_cast %81 : vector<2x16xf32> to vector<2x16x1xf32>
    %83 = vector.broadcast %82 : vector<2x16x1xf32> to vector<2x16x16xf32>
    %84 = arith.subf %80, %83 : vector<2x16x16xf32>
    %85 = math.exp %84 : vector<2x16x16xf32>
    %cst_27 = arith.constant dense<0.000000e+00> : vector<2x16xf32>
    %86 = vector.multi_reduction <add>, %85, %cst_27 [2] : vector<2x16x16xf32> to vector<2x16xf32>
    %87 = vector.shape_cast %86 : vector<2x16xf32> to vector<2x16x1xf32>
    %88 = tpu.reciprocal %87 {approx = true} : vector<2x16x1xf32> -> vector<2x16x1xf32>
    %89 = vector.broadcast %88 : vector<2x16x1xf32> to vector<2x16x16xf32>
    %90 = arith.mulf %85, %89 : vector<2x16x16xf32>
    %91 = arith.truncf %90 : vector<2x16x16xf32> to vector<2x16x16xbf16>
    "tpu.trace_start"() <{level = 10 : i32, message = "bqk,bkd->bqd"}> : () -> ()
    %cst_28 = arith.constant dense<0.000000e+00> : vector<2x16x8xf32>
    %92 = tpu.matmul %91, %76, %cst_28 {dimension_numbers = #tpu.dot_dimension_numbers<[2], [1], [1], [2], [0, 0, 0, 1, 1, 2], [0], [0]>} : vector<2x16x16xbf16>, vector<2x16x8xbf16>, vector<2x16x8xf32> -> vector<2x16x8xf32>
    "tpu.trace_stop"() : () -> ()
    %93 = vector.extract_strided_slice %23 {offsets = [0, 0, 24], sizes = [2, 16, 8], strides = [1, 1, 1]} : vector<2x16x32xf32> to vector<2x16x8xf32>
    %94 = arith.truncf %93 : vector<2x16x8xf32> to vector<2x16x8xbf16>
    %95 = vector.extract_strided_slice %24 {offsets = [0, 0, 24], sizes = [2, 16, 8], strides = [1, 1, 1]} : vector<2x16x32xf32> to vector<2x16x8xf32>
    %96 = arith.truncf %95 : vector<2x16x8xf32> to vector<2x16x8xbf16>
    %97 = vector.extract_strided_slice %25 {offsets = [0, 0, 24], sizes = [2, 16, 8], strides = [1, 1, 1]} : vector<2x16x32xf32> to vector<2x16x8xf32>
    %98 = arith.truncf %97 : vector<2x16x8xf32> to vector<2x16x8xbf16>
    "tpu.trace_start"() <{level = 10 : i32, message = "bqd,bkd->bqk"}> : () -> ()
    %cst_29 = arith.constant dense<0.000000e+00> : vector<2x16x16xf32>
    %99 = tpu.matmul %94, %96, %cst_29 {dimension_numbers = #tpu.dot_dimension_numbers<[2], [2], [1], [1], [0, 0, 0, 1, 1, 1], [0], [0]>} : vector<2x16x8xbf16>, vector<2x16x8xbf16>, vector<2x16x16xf32> -> vector<2x16x16xf32>
    "tpu.trace_stop"() : () -> ()
    %cst_30 = arith.constant 0.353553385 : f32
    %100 = vector.broadcast %cst_30 : f32 to vector<2x16x16xf32>
    %101 = arith.mulf %99, %100 : vector<2x16x16xf32>
    %102 = arith.addf %101, %26 : vector<2x16x16xf32>
    %cst_31 = arith.constant dense<0xFF800000> : vector<2x16xf32>
    %103 = vector.multi_reduction <maximumf>, %102, %cst_31 [2] : vector<2x16x16xf32> to vector<2x16xf32>
    %104 = vector.shape_cast %103 : vector<2x16xf32> to vector<2x16x1xf32>
    %105 = vector.broadcast %104 : vector<2x16x1xf32> to vector<2x16x16xf32>
    %106 = arith.subf %102, %105 : vector<2x16x16xf32>
    %107 = math.exp %106 : vector<2x16x16xf32>
    %cst_32 = arith.constant dense<0.000000e+00> : vector<2x16xf32>
    %108 = vector.multi_reduction <add>, %107, %cst_32 [2] : vector<2x16x16xf32> to vector<2x16xf32>
    %109 = vector.shape_cast %108 : vector<2x16xf32> to vector<2x16x1xf32>
    %110 = tpu.reciprocal %109 {approx = true} : vector<2x16x1xf32> -> vector<2x16x1xf32>
    %111 = vector.broadcast %110 : vector<2x16x1xf32> to vector<2x16x16xf32>
    %112 = arith.mulf %107, %111 : vector<2x16x16xf32>
    %113 = arith.truncf %112 : vector<2x16x16xf32> to vector<2x16x16xbf16>
    "tpu.trace_start"() <{level = 10 : i32, message = "bqk,bkd->bqd"}> : () -> ()
    %cst_33 = arith.constant dense<0.000000e+00> : vector<2x16x8xf32>
    %114 = tpu.matmul %113, %98, %cst_33 {dimension_numbers = #tpu.dot_dimension_numbers<[2], [1], [1], [2], [0, 0, 0, 1, 1, 2], [0], [0]>} : vector<2x16x16xbf16>, vector<2x16x8xbf16>, vector<2x16x8xf32> -> vector<2x16x8xf32>
    "tpu.trace_stop"() : () -> ()
    %115 = tpu.concatenate %48, %70, %92, %114 in 2 : vector<2x16x8xf32>, vector<2x16x8xf32>, vector<2x16x8xf32>, vector<2x16x8xf32> -> vector<2x16x32xf32>
    %116 = vector.shape_cast %115 : vector<2x16x32xf32> to vector<32x32xf32>
    %117 = arith.truncf %116 : vector<32x32xf32> to vector<32x32xbf16>
    %118 = vector.extract_strided_slice %6 {offsets = [0, 96], sizes = [32, 32], strides = [1, 1]} : vector<32x128xbf16> to vector<32x32xbf16>
    %cst_34 = arith.constant dense<0.000000e+00> : vector<32x32xf32>
    %119 = tpu.matmul %117, %118, %cst_34 {dimension_numbers = #tpu.dot_dimension_numbers<[1], [0], [0], [1], [0, 0, 1, 1], [], []>} : vector<32x32xbf16>, vector<32x32xbf16>, vector<32x32xf32> -> vector<32x32xf32>
    %120 = vector.extract_strided_slice %7 {offsets = [0, 96], sizes = [1, 32], strides = [1, 1]} : vector<1x128xf32> to vector<1x32xf32>
    %121 = vector.broadcast %120 : vector<1x32xf32> to vector<32x32xf32>
    %122 = arith.addf %119, %121 : vector<32x32xf32>
    %c0_35 = arith.constant 0 : index
    %c0_36 = arith.constant 0 : index
    %123 = vector.load %arg6[%c0_35, %c0_36] : memref<32x32xf32, #tpu.memory_space<vmem>>, vector<32x32xf32>
    tpu.vector_store %arg6[%c0_35, %c0_36], %122 {strides = array<i32>} : memref<32x32xf32, #tpu.memory_space<vmem>>, vector<32x32xf32>,
    return
  }
}

</mosaic_0001>

<llo_original>
// kernel: tpu_custom_call.1
$region0: #{tpu_custom_call.1}
  #allocation0 [shape = 'u32[]', space=smem, size = 0x4, offset = 0x4, fixed_abs, tag = 'smem constant byte address 0x4 - core index']
  #allocation1 [shape = 'u32[144,128]{1,0:T(1,128)}', space=vmem, size = 0x12000, scoped, tag = 'internal scratch']
  %s0 = inlined_call_operand.hbm [shape: f32[32,32], index: 0, kind: input, shape index: {}]
  %s1 = inlined_call_operand.hbm [shape: f32[32,32], index: 1, kind: input, shape index: {}]
  %s2 = inlined_call_operand.hbm [shape: f32[32,32], index: 2, kind: input, shape index: {}]
  %s3 = inlined_call_operand.hbm [shape: f32[2,16,16], index: 3, kind: input, shape index: {}]
  %s4 = inlined_call_operand.hbm [shape: bf16[32,128], index: 4, kind: input, shape index: {}]
  %s5 = inlined_call_operand.vmem [shape: f32[1,128], index: 5, kind: input, shape index: {}]
  %s6 = inlined_call_operand.hbm [shape: f32[32,32], index: 6, kind: output, shape index: {}]
  %s7 = sld [smem:[#allocation0]]
  $region54: #{tpu_custom_call.1} parent=0
    _
  %s9 = ssub.s32 1, %s7
  %s10 = scalar_select 0, %s9, %s7
  $region1: #{tpu_custom_call.1} parent=0
    #allocation2 [shape = 'u8[16384]{0}', space=vmem, size = 0x4000, scoped, tag = 'input window, operand 0, single buffered']
    #allocation3 [shape = 's32[1]{0}', space=sflag, size = 0x4, scoped, tag = 'scoped memory for tpu_custom_call.1']
    #allocation4 [shape = 's32[1]{0}', space=sflag, size = 0x4, scoped, tag = 'scoped memory for tpu_custom_call.1']
    #allocation5 [shape = 'u8[16384]{0}', space=vmem, size = 0x4000, scoped, tag = 'input window, operand 1, single buffered']
    #allocation6 [shape = 's32[1]{0}', space=sflag, size = 0x4, scoped, tag = 'scoped memory for tpu_custom_call.1']
    #allocation7 [shape = 'u8[16384]{0}', space=vmem, size = 0x4000, scoped, tag = 'input window, operand 2, single buffered']
    #allocation8 [shape = 'u8[16384]{0}', space=vmem, size = 0x4000, scoped, tag = 'input window, operand 3, single buffered']
    #allocation9 [shape = 's32[1]{0}', space=sflag, size = 0x4, scoped, tag = 'scoped memory for tpu_custom_call.1']
    #allocation10 [shape = 'u8[8192]{0}', space=vmem, size = 0x2000, scoped, tag = 'input window, operand 4, single buffered']
    #allocation11 [shape = 'u8[16384]{0}', space=vmem, size = 0x4000, scoped, tag = 'output window, operand 0, single buffered']
    %11 = vsyncpa [#allocation3], 0
    %12 = vsyncpa [#allocation6], 0
    %13 = vsyncpa [#allocation9], 0
    %14 = vsyncpa [#allocation4], 0
    // Predicated region
    $region2: #{tpu_custom_call.1} parent=1 // pred_check
      _
    $region3: #{tpu_custom_call.1} parent=1 // pred_check_branch
      %16 = sbr.rel (0) target = $region5
    $region4: #{tpu_custom_call.1} parent=1 // pred_region
      %s18 = ssub.s32 512, 512
      %19 = vsyncadd [#allocation3], %s18
      %s20 = sshll.u32 [#allocation2], 4
      %s21 = int_to_ptr.vmem [resolvable:$true] %s20
      %26 = dma.hbm_to_vmem [thread:$0]  %s0, 512, %s21, [#allocation3], 128, 128, 8
    $region5: #{tpu_custom_call.1} parent=1 // pred_fallthru
      _
    // Predicated region
    $region6: #{tpu_custom_call.1} parent=1 // pred_check
      _
    $region7: #{tpu_custom_call.1} parent=1 // pred_check_branch
      %28 = sbr.rel (0) target = $region9
    $region8: #{tpu_custom_call.1} parent=1 // pred_region
      %s30 = ssub.s32 512, 512
      %31 = vsyncadd [#allocation6], %s30
      %s32 = sshll.u32 [#allocation5], 4
      %s33 = int_to_ptr.vmem [resolvable:$true] %s32
      %38 = dma.hbm_to_vmem [thread:$0]  %s1, 512, %s33, [#allocation6], 128, 128, 8
    $region9: #{tpu_custom_call.1} parent=1 // pred_fallthru
      _
    // Predicated region
    $region10: #{tpu_custom_call.1} parent=1 // pred_check
      _
    $region11: #{tpu_custom_call.1} parent=1 // pred_check_branch
      %40 = sbr.rel (0) target = $region13
    $region12: #{tpu_custom_call.1} parent=1 // pred_region
      %s42 = ssub.s32 512, 512
      %43 = vsyncadd [#allocation6], %s42
      %s44 = sshll.u32 [#allocation7], 4
      %s45 = int_to_ptr.vmem [resolvable:$true] %s44
      %50 = dma.hbm_to_vmem [thread:$0]  %s2, 512, %s45, [#allocation6], 128, 128, 8
    $region13: #{tpu_custom_call.1} parent=1 // pred_fallthru
      _
    // Predicated region
    $region14: #{tpu_custom_call.1} parent=1 // pred_check
      _
    $region15: #{tpu_custom_call.1} parent=1 // pred_check_branch
      %52 = sbr.rel (0) target = $region17
    $region16: #{tpu_custom_call.1} parent=1 // pred_region
      %s54 = ssub.s32 512, 512
      %55 = vsyncadd [#allocation9], %s54
      %s56 = sshll.u32 [#allocation8], 4
      %s57 = int_to_ptr.vmem [resolvable:$true] %s56
      %62 = dma.hbm_to_vmem [thread:$0]  %s3, 512, %s57, [#allocation9], 128, 128, 8
    $region17: #{tpu_custom_call.1} parent=1 // pred_fallthru
      _
    // Predicated region
    $region18: #{tpu_custom_call.1} parent=1 // pred_check
      _
    $region19: #{tpu_custom_call.1} parent=1 // pred_check_branch
      %64 = sbr.rel (0) target = $region21
    $region20: #{tpu_custom_call.1} parent=1 // pred_region
      %s66 = ssub.s32 256, 256
      %67 = vsyncadd [#allocation9], %s66
      %s68 = sshll.u32 [#allocation10], 4
      %s69 = int_to_ptr.vmem [resolvable:$true] %s68
      %74 = dma.hbm_to_vmem [thread:$0]  %s4, 256, %s69, [#allocation9], 64, 64, 4
    $region21: #{tpu_custom_call.1} parent=1 // pred_fallthru
      _
    // Predicated region
    $region22: #{tpu_custom_call.1} parent=1 // pred_check
      _
    $region23: #{tpu_custom_call.1} parent=1 // pred_check_branch
      %76 = sbr.rel (0) target = $region25
    $region24: #{tpu_custom_call.1} parent=1 // pred_region
      _
    $region25: #{tpu_custom_call.1} parent=1 // pred_fallthru
      _
    // Predicated region
    $region26: #{tpu_custom_call.1} parent=1 // pred_check
      _
    $region27: #{tpu_custom_call.1} parent=1 // pred_check_branch
      %78 = sbr.rel (0) target = $region29
    $region28: #{tpu_custom_call.1} parent=1 // pred_region
      %79 = dma.done [#allocation3], 512
    $region29: #{tpu_custom_call.1} parent=1 // pred_fallthru
      _
    // Predicated region
    $region30: #{tpu_custom_call.1} parent=1 // pred_check
      _
    $region31: #{tpu_custom_call.1} parent=1 // pred_check_branch
      %81 = sbr.rel (0) target = $region33
    $region32: #{tpu_custom_call.1} parent=1 // pred_region
      %82 = dma.done [#allocation6], 512
    $region33: #{tpu_custom_call.1} parent=1 // pred_fallthru
      _
    // Predicated region
    $region34: #{tpu_custom_call.1} parent=1 // pred_check
      _
    $region35: #{tpu_custom_call.1} parent=1 // pred_check_branch
      %84 = sbr.rel (0) target = $region37
    $region36: #{tpu_custom_call.1} parent=1 // pred_region
      %85 = dma.done [#allocation6], 512
    $region37: #{tpu_custom_call.1} parent=1 // pred_fallthru
      _
    // Predicated region
    $region38: #{tpu_custom_call.1} parent=1 // pred_check
      _
    $region39: #{tpu_custom_call.1} parent=1 // pred_check_branch
      %87 = sbr.rel (0) target = $region41
    $region40: #{tpu_custom_call.1} parent=1 // pred_region
      %88 = dma.done [#allocation9], 512
    $region41: #{tpu_custom_call.1} parent=1 // pred_fallthru
      _
    // Predicated region
    $region42: #{tpu_custom_call.1} parent=1 // pred_check
      _
    $region43: #{tpu_custom_call.1} parent=1 // pred_check_branch
      %90 = sbr.rel (0) target = $region45
    $region44: #{tpu_custom_call.1} parent=1 // pred_region
      %91 = dma.done [#allocation9], 256
    $region45: #{tpu_custom_call.1} parent=1 // pred_fallthru
      _
    %v93 = vld [vmem:[#allocation2] sm:$0xff]
    %v94 = vld [vmem:[#allocation2 + $0x8] sm:$0xff]
    %v95 = vld [vmem:[#allocation2 + $0x10] sm:$0xff]
    %v96 = vld [vmem:[#allocation2 + $0x18] sm:$0xff]
    %v97 = vpack.c.bf16 %v94, %v93
    %v98 = vpack.c.bf16 %v96, %v95
    %v99 = vld [vmem:[#allocation5] sm:$0xff]
    %v100 = vld [vmem:[#allocation5 + $0x8] sm:$0xff]
    %v101 = vld [vmem:[#allocation5 + $0x10] sm:$0xff]
    %v102 = vld [vmem:[#allocation5 + $0x18] sm:$0xff]
    %v103 = vpack.c.bf16 %v100, %v99
    %v104 = vpack.c.bf16 %v102, %v101
    %v105 = vld [vmem:[#allocation7] sm:$0xff]
    %v106 = vld [vmem:[#allocation7 + $0x8] sm:$0xff]
    %v107 = vld [vmem:[#allocation7 + $0x10] sm:$0xff]
    %v108 = vld [vmem:[#allocation7 + $0x18] sm:$0xff]
    %v109 = vpack.c.bf16 %v106, %v105
    %v110 = vpack.c.bf16 %v108, %v107
    %v111 = vld [vmem:[#allocation10] sm:$0xf]
    %v112 = vld [vmem:[#allocation10 + $0x4] sm:$0xf]
    %v113 = vld [vmem:[#allocation10 + $0x8] sm:$0xf]
    %v114 = vld [vmem:[#allocation10 + $0xc] sm:$0xf]
    %v115 = vld [vmem:[%s5] sm:$0x1]
    %v117 = vlaneseq
    %v118 = vshrl.u32 %v117, 7
    %v119 = vsub.s32 0, %v118
    %v120 = vrot.slane %v115, %v119
    %v126 = vunpack.c.l.b16 %v111
    %v127 = vunpack.c.l.b16 %v112
    %v128 = vunpack.c.l.b16 %v113
    %v129 = vunpack.c.l.b16 %v114
    %v130 = vpack.c.b16 %v127, %v126
    %v131 = vpack.c.b16 %v129, %v128
    %vm134 = vcmask 261120
    %v136 = vsel %vm134, %v97, 0
    %v139 = vsel %vm134, %v98, 0
    %141 = vmatprep.subr.bf16.mxu0 0
    %142 = vmatpush1.bf16.msra.mxu0 0
    %143 = vmatprep.subr.bf16.mxu0 0
    %144 = vmatpush1.bf16.msra.mxu0 0
    %145 = vmatprep.subr.bf16.mxu0 0
    %146 = vmatpush1.bf16.msra.mxu0 0
    %147 = vmatprep.subr.bf16.mxu0 0
    %148 = vmatpush1.bf16.msra.mxu0 0
    %149 = vmatprep.subr.bf16.mxu0 0
    %150 = vmatpush1.bf16.msra.mxu0 0
    %151 = vmatprep.subr.bf16.mxu0 0
    %152 = vmatpush1.bf16.msra.mxu0 0
    %153 = vmatprep.subr.bf16.mxu0 0
    %154 = vmatpush1.bf16.msra.mxu0 %v131
    %155 = vmatprep.subr.bf16.mxu0 0
    %156 = vmatpush1.bf16.msra.mxu0 %v130
    %157 = vmatprep.subr.bf16.mxu0 0
    %158 = vmatpush2.bf16.msra.mxu0 0
    %159 = vmatprep.subr.bf16.mxu0 0
    %160 = vmatpush2.bf16.msra.mxu0 0
    %161 = vmatprep.subr.bf16.mxu0 0
    %162 = vmatpush2.bf16.msra.mxu0 0
    %163 = vmatprep.subr.bf16.mxu0 0
    %164 = vmatpush2.bf16.msra.mxu0 0
    %165 = vmatprep.subr.bf16.mxu0 0
    %166 = vmatpush2.bf16.msra.mxu0 0
    %167 = vmatprep.subr.bf16.mxu0 0
    %168 = vmatpush2.bf16.msra.mxu0 0
    %169 = vmatprep.subr.bf16.mxu0 0
    %170 = vmatpush2.bf16.msra.mxu0 0
    %171 = vmatprep.subr.bf16.mxu0 0
    %172 = vmatpush2.bf16.msra.mxu0 0
    %173 = vmatprep.mubr.bf16.mxu0 0
    %174 = vmatmul.mubr.bf16.gmra.mxu0 %v136
    %v175 = vpop.f32.mrf.mxu0
    %v176 = vadd.f32 %v120, %v175
    %v177 = vpop.f32.mrf.mxu0
    %v178 = vpop.f32.mrf.mxu0
    %v179 = vadd.f32 %v120, %v178
    %v180 = vpop.f32.mrf.mxu0
    %181 = vmatprep.mubr.bf16.mxu0 0
    %182 = vmatmul.mubr.bf16.gmra.mxu0 %v139
    %v183 = vpop.f32.mrf.mxu0
    %v184 = vadd.f32 %v120, %v183
    %v185 = vpop.f32.mrf.mxu0
    %v186 = vpop.f32.mrf.mxu0
    %v187 = vadd.f32 %v120, %v186
    %v188 = vpop.f32.mrf.mxu0
    %189 = vdwg.mxu0
    %190 = vrot.lane.b32.xlu0 %v130, 96
    %v191 = vpop.permute.xlu0 %190
    %192 = vrot.lane.b32.xlu0 %v131, 96
    %v193 = vpop.permute.xlu0 %192
    %196 = vrot.lane.b32.xlu0 %v120, 96
    %v197 = vpop.permute.xlu0 %196
    %v200 = vsel %vm134, %v103, 0
    %v203 = vsel %vm134, %v104, 0
    %205 = vmatprep.subr.bf16.mxu0 0
    %206 = vmatpush1.bf16.msra.mxu0 0
    %207 = vmatprep.subr.bf16.mxu0 0
    %208 = vmatpush1.bf16.msra.mxu0 0
    %209 = vmatprep.subr.bf16.mxu0 0
    %210 = vmatpush1.bf16.msra.mxu0 0
    %211 = vmatprep.subr.bf16.mxu0 0
    %212 = vmatpush1.bf16.msra.mxu0 0
    %213 = vmatprep.subr.bf16.mxu0 0
    %214 = vmatpush1.bf16.msra.mxu0 0
    %215 = vmatprep.subr.bf16.mxu0 0
    %216 = vmatpush1.bf16.msra.mxu0 0
    %217 = vmatprep.subr.bf16.mxu0 0
    %218 = vmatpush1.bf16.msra.mxu0 %v193
    %219 = vmatprep.subr.bf16.mxu0 0
    %220 = vmatpush1.bf16.msra.mxu0 %v191
    %221 = vmatprep.subr.bf16.mxu0 0
    %222 = vmatpush2.bf16.msra.mxu0 0
    %223 = vmatprep.subr.bf16.mxu0 0
    %224 = vmatpush2.bf16.msra.mxu0 0
    %225 = vmatprep.subr.bf16.mxu0 0
    %226 = vmatpush2.bf16.msra.mxu0 0
    %227 = vmatprep.subr.bf16.mxu0 0
    %228 = vmatpush2.bf16.msra.mxu0 0
    %229 = vmatprep.subr.bf16.mxu0 0
    %230 = vmatpush2.bf16.msra.mxu0 0
    %231 = vmatprep.subr.bf16.mxu0 0
    %232 = vmatpush2.bf16.msra.mxu0 0
    %233 = vmatprep.subr.bf16.mxu0 0
    %234 = vmatpush2.bf16.msra.mxu0 0
    %235 = vmatprep.subr.bf16.mxu0 0
    %236 = vmatpush2.bf16.msra.mxu0 0
    %237 = vmatprep.mubr.bf16.mxu0 0
    %238 = vmatmul.mubr.bf16.gmra.mxu0 %v200
    %v239 = vpop.f32.mrf.mxu0
    %v240 = vadd.f32 %v197, %v239
    %v241 = vpop.f32.mrf.mxu0
    %v242 = vpop.f32.mrf.mxu0
    %v243 = vadd.f32 %v197, %v242
    %v244 = vpop.f32.mrf.mxu0
    %245 = vmatprep.mubr.bf16.mxu0 0
    %246 = vmatmul.mubr.bf16.gmra.mxu0 %v203
    %v247 = vpop.f32.mrf.mxu0
    %v248 = vadd.f32 %v197, %v247
    %v249 = vpop.f32.mrf.mxu0
    %v250 = vpop.f32.mrf.mxu0
    %v251 = vadd.f32 %v197, %v250
    %v252 = vpop.f32.mrf.mxu0
    %253 = vdwg.mxu0
    %254 = vrot.lane.b32.xlu0 %v130, 64
    %v255 = vpop.permute.xlu0 %254
    %256 = vrot.lane.b32.xlu0 %v131, 64
    %v257 = vpop.permute.xlu0 %256
    %260 = vrot.lane.b32.xlu0 %v120, 64
    %v261 = vpop.permute.xlu0 %260
    %v264 = vsel %vm134, %v109, 0
    %v267 = vsel %vm134, %v110, 0
    %269 = vmatprep.subr.bf16.mxu0 0
    %270 = vmatpush1.bf16.msra.mxu0 0
    %271 = vmatprep.subr.bf16.mxu0 0
    %272 = vmatpush1.bf16.msra.mxu0 0
    %273 = vmatprep.subr.bf16.mxu0 0
    %274 = vmatpush1.bf16.msra.mxu0 0
    %275 = vmatprep.subr.bf16.mxu0 0
    %276 = vmatpush1.bf16.msra.mxu0 0
    %277 = vmatprep.subr.bf16.mxu0 0
    %278 = vmatpush1.bf16.msra.mxu0 0
    %279 = vmatprep.subr.bf16.mxu0 0
    %280 = vmatpush1.bf16.msra.mxu0 0
    %281 = vmatprep.subr.bf16.mxu0 0
    %282 = vmatpush1.bf16.msra.mxu0 %v257
    %283 = vmatprep.subr.bf16.mxu0 0
    %284 = vmatpush1.bf16.msra.mxu0 %v255
    %285 = vmatprep.subr.bf16.mxu0 0
    %286 = vmatpush2.bf16.msra.mxu0 0
    %287 = vmatprep.subr.bf16.mxu0 0
    %288 = vmatpush2.bf16.msra.mxu0 0
    %289 = vmatprep.subr.bf16.mxu0 0
    %290 = vmatpush2.bf16.msra.mxu0 0
    %291 = vmatprep.subr.bf16.mxu0 0
    %292 = vmatpush2.bf16.msra.mxu0 0
    %293 = vmatprep.subr.bf16.mxu0 0
    %294 = vmatpush2.bf16.msra.mxu0 0
    %295 = vmatprep.subr.bf16.mxu0 0
    %296 = vmatpush2.bf16.msra.mxu0 0
    %297 = vmatprep.subr.bf16.mxu0 0
    %298 = vmatpush2.bf16.msra.mxu0 0
    %299 = vmatprep.subr.bf16.mxu0 0
    %300 = vmatpush2.bf16.msra.mxu0 0
    %301 = vmatprep.mubr.bf16.mxu0 0
    %302 = vmatmul.mubr.bf16.gmra.mxu0 %v264
    %v303 = vpop.f32.mrf.mxu0
    %v304 = vadd.f32 %v261, %v303
    %v305 = vpop.f32.mrf.mxu0
    %v306 = vpop.f32.mrf.mxu0
    %v307 = vadd.f32 %v261, %v306
    %v308 = vpop.f32.mrf.mxu0
    %309 = vmatprep.mubr.bf16.mxu0 0
    %310 = vmatmul.mubr.bf16.gmra.mxu0 %v267
    %v311 = vpop.f32.mrf.mxu0
    %v312 = vadd.f32 %v261, %v311
    %v313 = vpop.f32.mrf.mxu0
    %v314 = vpop.f32.mrf.mxu0
    %v315 = vadd.f32 %v261, %v314
    %v316 = vpop.f32.mrf.mxu0
    %317 = vdwg.mxu0
    %v318 = vld [vmem:[#allocation8] sm:$0xff]
    %v319 = vld [vmem:[#allocation8 + $0x8] sm:$0xff]
    %v320 = vld [vmem:[#allocation8 + $0x10] sm:$0xff]
    %v321 = vld [vmem:[#allocation8 + $0x18] sm:$0xff]
    %v322 = vpack.c.bf16 %v179, %v176
    %v323 = vpack.c.bf16 %v187, %v184
    %v324 = vpack.c.bf16 %v243, %v240
    %v325 = vpack.c.bf16 %v251, %v248
    %v326 = vpack.c.bf16 %v307, %v304
    %v327 = vpack.c.bf16 %v315, %v312
    %vm328 = vcmask 64512
    %v330 = vsel %vm328, %v322, 0
    %v333 = vsel %vm328, %v324, 0
    %335 = vmatprep.subr.bf16.mxu0 0
    %336 = vmatpush1.bf16.xpose.msra.mxu0 0
    %337 = vmatprep.subr.bf16.mxu0 0
    %338 = vmatpush1.bf16.xpose.msra.mxu0 0
    %339 = vmatprep.subr.bf16.mxu0 0
    %340 = vmatpush1.bf16.xpose.msra.mxu0 0
    %341 = vmatprep.subr.bf16.mxu0 0
    %342 = vmatpush1.bf16.xpose.msra.mxu0 0
    %343 = vmatprep.subr.bf16.mxu0 0
    %344 = vmatpush1.bf16.xpose.msra.mxu0 0
    %345 = vmatprep.subr.bf16.mxu0 0
    %346 = vmatpush1.bf16.xpose.msra.mxu0 0
    %347 = vmatprep.subr.bf16.mxu0 0
    %348 = vmatpush1.bf16.xpose.msra.mxu0 0
    %349 = vmatprep.subr.bf16.mxu0 0
    %350 = vmatpush1.bf16.xpose.msra.mxu0 %v333
    %351 = vmatprep.subr.bf16.mxu0 0
    %352 = vmatpush2.bf16.xpose.msra.mxu0 0
    %353 = vmatprep.subr.bf16.mxu0 0
    %354 = vmatpush2.bf16.xpose.msra.mxu0 0
    %355 = vmatprep.subr.bf16.mxu0 0
    %356 = vmatpush2.bf16.xpose.msra.mxu0 0
    %357 = vmatprep.subr.bf16.mxu0 0
    %358 = vmatpush2.bf16.xpose.msra.mxu0 0
    %359 = vmatprep.subr.bf16.mxu0 0
    %360 = vmatpush2.bf16.xpose.msra.mxu0 0
    %361 = vmatprep.subr.bf16.mxu0 0
    %362 = vmatpush2.bf16.xpose.msra.mxu0 0
    %363 = vmatprep.subr.bf16.mxu0 0
    %364 = vmatpush2.bf16.xpose.msra.mxu0 0
    %365 = vmatprep.subr.bf16.mxu0 0
    %366 = vmatpush2.bf16.xpose.msra.mxu0 0
    %367 = vmatprep.mubr.bf16.mxu0 0
    %368 = vmatmul.mubr.bf16.gmra.mxu0 %v330
    %v369 = vpop.f32.mrf.mxu0
    %v370 = vadd.f32 0.0, %v369
    %v371 = vpop.f32.mrf.mxu0
    %v372 = vpop.f32.mrf.mxu0
    %v373 = vadd.f32 0.0, %v372
    %v374 = vpop.f32.mrf.mxu0
    %375 = vdwg.mxu0
    %v377 = vsel %vm328, %v323, 0
    %v380 = vsel %vm328, %v325, 0
    %382 = vmatprep.subr.bf16.mxu0 0
    %383 = vmatpush1.bf16.xpose.msra.mxu0 0
    %384 = vmatprep.subr.bf16.mxu0 0
    %385 = vmatpush1.bf16.xpose.msra.mxu0 0
    %386 = vmatprep.subr.bf16.mxu0 0
    %387 = vmatpush1.bf16.xpose.msra.mxu0 0
    %388 = vmatprep.subr.bf16.mxu0 0
    %389 = vmatpush1.bf16.xpose.msra.mxu0 0
    %390 = vmatprep.subr.bf16.mxu0 0
    %391 = vmatpush1.bf16.xpose.msra.mxu0 0
    %392 = vmatprep.subr.bf16.mxu0 0
    %393 = vmatpush1.bf16.xpose.msra.mxu0 0
    %394 = vmatprep.subr.bf16.mxu0 0
    %395 = vmatpush1.bf16.xpose.msra.mxu0 0
    %396 = vmatprep.subr.bf16.mxu0 0
    %397 = vmatpush1.bf16.xpose.msra.mxu0 %v380
    %398 = vmatprep.subr.bf16.mxu0 0
    %399 = vmatpush2.bf16.xpose.msra.mxu0 0
    %400 = vmatprep.subr.bf16.mxu0 0
    %401 = vmatpush2.bf16.xpose.msra.mxu0 0
    %402 = vmatprep.subr.bf16.mxu0 0
    %403 = vmatpush2.bf16.xpose.msra.mxu0 0
    %404 = vmatprep.subr.bf16.mxu0 0
    %405 = vmatpush2.bf16.xpose.msra.mxu0 0
    %406 = vmatprep.subr.bf16.mxu0 0
    %407 = vmatpush2.bf16.xpose.msra.mxu0 0
    %408 = vmatprep.subr.bf16.mxu0 0
    %409 = vmatpush2.bf16.xpose.msra.mxu0 0
    %410 = vmatprep.subr.bf16.mxu0 0
    %411 = vmatpush2.bf16.xpose.msra.mxu0 0
    %412 = vmatprep.subr.bf16.mxu0 0
    %413 = vmatpush2.bf16.xpose.msra.mxu0 0
    %414 = vmatprep.mubr.bf16.mxu0 0
    %415 = vmatmul.mubr.bf16.gmra.mxu0 %v377
    %v416 = vpop.f32.mrf.mxu0
    %v417 = vadd.f32 0.0, %v416
    %v418 = vpop.f32.mrf.mxu0
    %v419 = vpop.f32.mrf.mxu0
    %v420 = vadd.f32 0.0, %v419
    %v421 = vpop.f32.mrf.mxu0
    %422 = vdwg.mxu0
    %v423 = vmul.f32 %v370, 0.35355338
    %v424 = vmul.f32 %v373, 0.35355338
    %v425 = vmul.f32 %v417, 0.35355338
    %v426 = vmul.f32 %v420, 0.35355338
    %v427 = vadd.f32 %v423, %v318
    %v428 = vadd.f32 %v424, %v319
    %v429 = vadd.f32 %v425, %v320
    %v430 = vadd.f32 %v426, %v321
    %vm431 = vcmask 130048
    %v432 = vsel %vm431, %v427, -inf
    %433 = vmax.xlane.f32.xlu0 %v432
    %v434 = vpop.xlane.xlu0 %433
    %v435 = vsel %vm431, %v428, -inf
    %436 = vmax.xlane.f32.xlu0 %v435
    %v437 = vpop.xlane.xlu0 %436
    %v438 = vsel %vm431, %v429, -inf
    %439 = vmax.xlane.f32.xlu0 %v438
    %v440 = vpop.xlane.xlu0 %439
    %v441 = vsel %vm431, %v430, -inf
    %442 = vmax.xlane.f32.xlu0 %v441
    %v443 = vpop.xlane.xlu0 %442
    %v444 = vsub.f32 %v427, %v434
    %v445 = vsub.f32 %v428, %v437
    %v446 = vsub.f32 %v429, %v440
    %v447 = vsub.f32 %v430, %v443
    %v448 = vmul.f32 %v444, 1.442695
    %v449 = vpow.pop %v448
    %v450 = vmul.f32 %v445, 1.442695
    %v451 = vpow.pop %v450
    %v452 = vmul.f32 %v446, 1.442695
    %v453 = vpow.pop %v452
    %v454 = vmul.f32 %v447, 1.442695
    %v455 = vpow.pop %v454
    %v456 = vsel %vm431, %v449, 0.0
    %457 = vadd.xlane.f32.xlu0 %v456
    %v458 = vpop.xlane.xlu0 %457
    %v459 = vsel %vm431, %v451, 0.0
    %460 = vadd.xlane.f32.xlu0 %v459
    %v461 = vpop.xlane.xlu0 %460
    %v462 = vsel %vm431, %v453, 0.0
    %463 = vadd.xlane.f32.xlu0 %v462
    %v464 = vpop.xlane.xlu0 %463
    %v465 = vsel %vm431, %v455, 0.0
    %466 = vadd.xlane.f32.xlu0 %v465
    %v467 = vpop.xlane.xlu0 %466
    %v468 = vrcp.pop %v458
    %v469 = vrcp.pop %v461
    %v470 = vrcp.pop %v464
    %v471 = vrcp.pop %v467
    %v472 = vmul.f32 %v449, %v468
    %v473 = vmul.f32 %v451, %v469
    %v474 = vmul.f32 %v453, %v470
    %v475 = vmul.f32 %v455, %v471
    %v476 = vpack.c.bf16 %v473, %v472
    %v477 = vpack.c.bf16 %v475, %v474
    %v479 = vsel %vm431, %v476, 0
    %481 = vmatprep.subr.bf16.mxu0 0
    %482 = vmatpush1.bf16.msra.mxu0 0
    %483 = vmatprep.subr.bf16.mxu0 0
    %484 = vmatpush1.bf16.msra.mxu0 0
    %485 = vmatprep.subr.bf16.mxu0 0
    %486 = vmatpush1.bf16.msra.mxu0 0
    %487 = vmatprep.subr.bf16.mxu0 0
    %488 = vmatpush1.bf16.msra.mxu0 0
    %489 = vmatprep.subr.bf16.mxu0 0
    %490 = vmatpush1.bf16.msra.mxu0 0
    %491 = vmatprep.subr.bf16.mxu0 0
    %492 = vmatpush1.bf16.msra.mxu0 0
    %493 = vmatprep.subr.bf16.mxu0 0
    %494 = vmatpush1.bf16.msra.mxu0 0
    %495 = vmatprep.subr.bf16.mxu0 0
    %496 = vmatpush1.bf16.msra.mxu0 %v326
    %497 = vmatprep.subr.bf16.mxu0 0
    %498 = vmatpush2.bf16.msra.mxu0 0
    %499 = vmatprep.subr.bf16.mxu0 0
    %500 = vmatpush2.bf16.msra.mxu0 0
    %501 = vmatprep.subr.bf16.mxu0 0
    %502 = vmatpush2.bf16.msra.mxu0 0
    %503 = vmatprep.subr.bf16.mxu0 0
    %504 = vmatpush2.bf16.msra.mxu0 0
    %505 = vmatprep.subr.bf16.mxu0 0
    %506 = vmatpush2.bf16.msra.mxu0 0
    %507 = vmatprep.subr.bf16.mxu0 0
    %508 = vmatpush2.bf16.msra.mxu0 0
    %509 = vmatprep.subr.bf16.mxu0 0
    %510 = vmatpush2.bf16.msra.mxu0 0
    %511 = vmatprep.subr.bf16.mxu0 0
    %512 = vmatpush2.bf16.msra.mxu0 0
    %513 = vmatprep.mubr.bf16.mxu0 0
    %514 = vmatmul.mubr.bf16.gmra.mxu0 %v479
    %v515 = vpop.f32.mrf.mxu0
    %v516 = vadd.f32 0.0, %v515
    %v517 = vpop.f32.mrf.mxu0
    %v518 = vpop.f32.mrf.mxu0
    %v519 = vadd.f32 0.0, %v518
    %v520 = vpop.f32.mrf.mxu0
    %521 = vdwg.mxu0
    %v523 = vsel %vm431, %v477, 0
    %525 = vmatprep.subr.bf16.mxu0 0
    %526 = vmatpush1.bf16.msra.mxu0 0
    %527 = vmatprep.subr.bf16.mxu0 0
    %528 = vmatpush1.bf16.msra.mxu0 0
    %529 = vmatprep.subr.bf16.mxu0 0
    %530 = vmatpush1.bf16.msra.mxu0 0
    %531 = vmatprep.subr.bf16.mxu0 0
    %532 = vmatpush1.bf16.msra.mxu0 0
    %533 = vmatprep.subr.bf16.mxu0 0
    %534 = vmatpush1.bf16.msra.mxu0 0
    %535 = vmatprep.subr.bf16.mxu0 0
    %536 = vmatpush1.bf16.msra.mxu0 0
    %537 = vmatprep.subr.bf16.mxu0 0
    %538 = vmatpush1.bf16.msra.mxu0 0
    %539 = vmatprep.subr.bf16.mxu0 0
    %540 = vmatpush1.bf16.msra.mxu0 %v327
    %541 = vmatprep.subr.bf16.mxu0 0
    %542 = vmatpush2.bf16.msra.mxu0 0
    %543 = vmatprep.subr.bf16.mxu0 0
    %544 = vmatpush2.bf16.msra.mxu0 0
    %545 = vmatprep.subr.bf16.mxu0 0
    %546 = vmatpush2.bf16.msra.mxu0 0
    %547 = vmatprep.subr.bf16.mxu0 0
    %548 = vmatpush2.bf16.msra.mxu0 0
    %549 = vmatprep.subr.bf16.mxu0 0
    %550 = vmatpush2.bf16.msra.mxu0 0
    %551 = vmatprep.subr.bf16.mxu0 0
    %552 = vmatpush2.bf16.msra.mxu0 0
    %553 = vmatprep.subr.bf16.mxu0 0
    %554 = vmatpush2.bf16.msra.mxu0 0
    %555 = vmatprep.subr.bf16.mxu0 0
    %556 = vmatpush2.bf16.msra.mxu0 0
    %557 = vmatprep.mubr.bf16.mxu0 0
    %558 = vmatmul.mubr.bf16.gmra.mxu0 %v523
    %v559 = vpop.f32.mrf.mxu0
    %v560 = vadd.f32 0.0, %v559
    %v561 = vpop.f32.mrf.mxu0
    %v562 = vpop.f32.mrf.mxu0
    %v563 = vadd.f32 0.0, %v562
    %v564 = vpop.f32.mrf.mxu0
    %565 = vdwg.mxu0
    %567 = vrot.lane.b32.xlu0 %v322, 120
    %v568 = vpop.permute.xlu0 %567
    %570 = vrot.lane.b32.xlu0 %v324, 120
    %v571 = vpop.permute.xlu0 %570
    %v573 = vsel %vm328, %v568, 0
    %v576 = vsel %vm328, %v571, 0
    %578 = vmatprep.subr.bf16.mxu0 0
    %579 = vmatpush1.bf16.xpose.msra.mxu0 0
    %580 = vmatprep.subr.bf16.mxu0 0
    %581 = vmatpush1.bf16.xpose.msra.mxu0 0
    %582 = vmatprep.subr.bf16.mxu0 0
    %583 = vmatpush1.bf16.xpose.msra.mxu0 0
    %584 = vmatprep.subr.bf16.mxu0 0
    %585 = vmatpush1.bf16.xpose.msra.mxu0 0
    %586 = vmatprep.subr.bf16.mxu0 0
    %587 = vmatpush1.bf16.xpose.msra.mxu0 0
    %588 = vmatprep.subr.bf16.mxu0 0
    %589 = vmatpush1.bf16.xpose.msra.mxu0 0
    %590 = vmatprep.subr.bf16.mxu0 0
    %591 = vmatpush1.bf16.xpose.msra.mxu0 0
    %592 = vmatprep.subr.bf16.mxu0 0
    %593 = vmatpush1.bf16.xpose.msra.mxu0 %v576
    %594 = vmatprep.subr.bf16.mxu0 0
    %595 = vmatpush2.bf16.xpose.msra.mxu0 0
    %596 = vmatprep.subr.bf16.mxu0 0
    %597 = vmatpush2.bf16.xpose.msra.mxu0 0
    %598 = vmatprep.subr.bf16.mxu0 0
    %599 = vmatpush2.bf16.xpose.msra.mxu0 0
    %600 = vmatprep.subr.bf16.mxu0 0
    %601 = vmatpush2.bf16.xpose.msra.mxu0 0
    %602 = vmatprep.subr.bf16.mxu0 0
    %603 = vmatpush2.bf16.xpose.msra.mxu0 0
    %604 = vmatprep.subr.bf16.mxu0 0
    %605 = vmatpush2.bf16.xpose.msra.mxu0 0
    %606 = vmatprep.subr.bf16.mxu0 0
    %607 = vmatpush2.bf16.xpose.msra.mxu0 0
    %608 = vmatprep.subr.bf16.mxu0 0
    %609 = vmatpush2.bf16.xpose.msra.mxu0 0
    %610 = vmatprep.mubr.bf16.mxu0 0
    %611 = vmatmul.mubr.bf16.gmra.mxu0 %v573
    %v612 = vpop.f32.mrf.mxu0
    %v613 = vadd.f32 0.0, %v612
    %v614 = vpop.f32.mrf.mxu0
    %v615 = vpop.f32.mrf.mxu0
    %v616 = vadd.f32 0.0, %v615
    %v617 = vpop.f32.mrf.mxu0
    %618 = vdwg.mxu0
    %620 = vrot.lane.b32.xlu0 %v323, 120
    %v621 = vpop.permute.xlu0 %620
    %623 = vrot.lane.b32.xlu0 %v325, 120
    %v624 = vpop.permute.xlu0 %623
    %v626 = vsel %vm328, %v621, 0
    %v629 = vsel %vm328, %v624, 0
    %631 = vmatprep.subr.bf16.mxu0 0
    %632 = vmatpush1.bf16.xpose.msra.mxu0 0
    %633 = vmatprep.subr.bf16.mxu0 0
    %634 = vmatpush1.bf16.xpose.msra.mxu0 0
    %635 = vmatprep.subr.bf16.mxu0 0
    %636 = vmatpush1.bf16.xpose.msra.mxu0 0
    %637 = vmatprep.subr.bf16.mxu0 0
    %638 = vmatpush1.bf16.xpose.msra.mxu0 0
    %639 = vmatprep.subr.bf16.mxu0 0
    %640 = vmatpush1.bf16.xpose.msra.mxu0 0
    %641 = vmatprep.subr.bf16.mxu0 0
    %642 = vmatpush1.bf16.xpose.msra.mxu0 0
    %643 = vmatprep.subr.bf16.mxu0 0
    %644 = vmatpush1.bf16.xpose.msra.mxu0 0
    %645 = vmatprep.subr.bf16.mxu0 0
    %646 = vmatpush1.bf16.xpose.msra.mxu0 %v629
    %647 = vmatprep.subr.bf16.mxu0 0
    %648 = vmatpush2.bf16.xpose.msra.mxu0 0
    %649 = vmatprep.subr.bf16.mxu0 0
    %650 = vmatpush2.bf16.xpose.msra.mxu0 0
    %651 = vmatprep.subr.bf16.mxu0 0
    %652 = vmatpush2.bf16.xpose.msra.mxu0 0
    %653 = vmatprep.subr.bf16.mxu0 0
    %654 = vmatpush2.bf16.xpose.msra.mxu0 0
    %655 = vmatprep.subr.bf16.mxu0 0
    %656 = vmatpush2.bf16.xpose.msra.mxu0 0
    %657 = vmatprep.subr.bf16.mxu0 0
    %658 = vmatpush2.bf16.xpose.msra.mxu0 0
    %659 = vmatprep.subr.bf16.mxu0 0
    %660 = vmatpush2.bf16.xpose.msra.mxu0 0
    %661 = vmatprep.subr.bf16.mxu0 0
    %662 = vmatpush2.bf16.xpose.msra.mxu0 0
    %663 = vmatprep.mubr.bf16.mxu0 0
    %664 = vmatmul.mubr.bf16.gmra.mxu0 %v626
    %v665 = vpop.f32.mrf.mxu0
    %v666 = vadd.f32 0.0, %v665
    %v667 = vpop.f32.mrf.mxu0
    %v668 = vpop.f32.mrf.mxu0
    %v669 = vadd.f32 0.0, %v668
    %v670 = vpop.f32.mrf.mxu0
    %671 = vdwg.mxu0
    %v672 = vmul.f32 %v613, 0.35355338
    %v673 = vmul.f32 %v616, 0.35355338
    %v674 = vmul.f32 %v666, 0.35355338
    %v675 = vmul.f32 %v669, 0.35355338
    %v676 = vadd.f32 %v672, %v318
    %v677 = vadd.f32 %v673, %v319
    %v678 = vadd.f32 %v674, %v320
    %v679 = vadd.f32 %v675, %v321
    %v680 = vsel %vm431, %v676, -inf
    %681 = vmax.xlane.f32.xlu0 %v680
    %v682 = vpop.xlane.xlu0 %681
    %v683 = vsel %vm431, %v677, -inf
    %684 = vmax.xlane.f32.xlu0 %v683
    %v685 = vpop.xlane.xlu0 %684
    %v686 = vsel %vm431, %v678, -inf
    %687 = vmax.xlane.f32.xlu0 %v686
    %v688 = vpop.xlane.xlu0 %687
    %v689 = vsel %vm431, %v679, -inf
    %690 = vmax.xlane.f32.xlu0 %v689
    %v691 = vpop.xlane.xlu0 %690
    %v692 = vsub.f32 %v676, %v682
    %v693 = vsub.f32 %v677, %v685
    %v694 = vsub.f32 %v678, %v688
    %v695 = vsub.f32 %v679, %v691
    %v696 = vmul.f32 %v692, 1.442695
    %v697 = vpow.pop %v696
    %v698 = vmul.f32 %v693, 1.442695
    %v699 = vpow.pop %v698
    %v700 = vmul.f32 %v694, 1.442695
    %v701 = vpow.pop %v700
    %v702 = vmul.f32 %v695, 1.442695
    %v703 = vpow.pop %v702
    %v704 = vsel %vm431, %v697, 0.0
    %705 = vadd.xlane.f32.xlu0 %v704
    %v706 = vpop.xlane.xlu0 %705
    %v707 = vsel %vm431, %v699, 0.0
    %708 = vadd.xlane.f32.xlu0 %v707
    %v709 = vpop.xlane.xlu0 %708
    %v710 = vsel %vm431, %v701, 0.0
    %711 = vadd.xlane.f32.xlu0 %v710
    %v712 = vpop.xlane.xlu0 %711
    %v713 = vsel %vm431, %v703, 0.0
    %714 = vadd.xlane.f32.xlu0 %v713
    %v715 = vpop.xlane.xlu0 %714
    %v716 = vrcp.pop %v706
    %v717 = vrcp.pop %v709
    %v718 = vrcp.pop %v712
    %v719 = vrcp.pop %v715
    %v720 = vmul.f32 %v697, %v716
    %v721 = vmul.f32 %v699, %v717
    %v722 = vmul.f32 %v701, %v718
    %v723 = vmul.f32 %v703, %v719
    %v724 = vpack.c.bf16 %v721, %v720
    %v725 = vpack.c.bf16 %v723, %v722
    %727 = vrot.lane.b32.xlu0 %v326, 120
    %v728 = vpop.permute.xlu0 %727
    %v731 = vsel %vm431, %v724, 0
    %733 = vmatprep.subr.bf16.mxu0 0
    %734 = vmatpush1.bf16.msra.mxu0 0
    %735 = vmatprep.subr.bf16.mxu0 0
    %736 = vmatpush1.bf16.msra.mxu0 0
    %737 = vmatprep.subr.bf16.mxu0 0
    %738 = vmatpush1.bf16.msra.mxu0 0
    %739 = vmatprep.subr.bf16.mxu0 0
    %740 = vmatpush1.bf16.msra.mxu0 0
    %741 = vmatprep.subr.bf16.mxu0 0
    %742 = vmatpush1.bf16.msra.mxu0 0
    %743 = vmatprep.subr.bf16.mxu0 0
    %744 = vmatpush1.bf16.msra.mxu0 0
    %745 = vmatprep.subr.bf16.mxu0 0
    %746 = vmatpush1.bf16.msra.mxu0 0
    %747 = vmatprep.subr.bf16.mxu0 0
    %748 = vmatpush1.bf16.msra.mxu0 %v728
    %749 = vmatprep.subr.bf16.mxu0 0
    %750 = vmatpush2.bf16.msra.mxu0 0
    %751 = vmatprep.subr.bf16.mxu0 0
    %752 = vmatpush2.bf16.msra.mxu0 0
    %753 = vmatprep.subr.bf16.mxu0 0
    %754 = vmatpush2.bf16.msra.mxu0 0
    %755 = vmatprep.subr.bf16.mxu0 0
    %756 = vmatpush2.bf16.msra.mxu0 0
    %757 = vmatprep.subr.bf16.mxu0 0
    %758 = vmatpush2.bf16.msra.mxu0 0
    %759 = vmatprep.subr.bf16.mxu0 0
    %760 = vmatpush2.bf16.msra.mxu0 0
    %761 = vmatprep.subr.bf16.mxu0 0
    %762 = vmatpush2.bf16.msra.mxu0 0
    %763 = vmatprep.subr.bf16.mxu0 0
    %764 = vmatpush2.bf16.msra.mxu0 0
    %765 = vmatprep.mubr.bf16.mxu0 0
    %766 = vmatmul.mubr.bf16.gmra.mxu0 %v731
    %v767 = vpop.f32.mrf.mxu0
    %v768 = vadd.f32 0.0, %v767
    %v769 = vpop.f32.mrf.mxu0
    %v770 = vpop.f32.mrf.mxu0
    %v771 = vadd.f32 0.0, %v770
    %v772 = vpop.f32.mrf.mxu0
    %773 = vdwg.mxu0
    %775 = vrot.lane.b32.xlu0 %v327, 120
    %v776 = vpop.permute.xlu0 %775
    %v779 = vsel %vm431, %v725, 0
    %781 = vmatprep.subr.bf16.mxu0 0
    %782 = vmatpush1.bf16.msra.mxu0 0
    %783 = vmatprep.subr.bf16.mxu0 0
    %784 = vmatpush1.bf16.msra.mxu0 0
    %785 = vmatprep.subr.bf16.mxu0 0
    %786 = vmatpush1.bf16.msra.mxu0 0
    %787 = vmatprep.subr.bf16.mxu0 0
    %788 = vmatpush1.bf16.msra.mxu0 0
    %789 = vmatprep.subr.bf16.mxu0 0
    %790 = vmatpush1.bf16.msra.mxu0 0
    %791 = vmatprep.subr.bf16.mxu0 0
    %792 = vmatpush1.bf16.msra.mxu0 0
    %793 = vmatprep.subr.bf16.mxu0 0
    %794 = vmatpush1.bf16.msra.mxu0 0
    %795 = vmatprep.subr.bf16.mxu0 0
    %796 = vmatpush1.bf16.msra.mxu0 %v776
    %797 = vmatprep.subr.bf16.mxu0 0
    %798 = vmatpush2.bf16.msra.mxu0 0
    %799 = vmatprep.subr.bf16.mxu0 0
    %800 = vmatpush2.bf16.msra.mxu0 0
    %801 = vmatprep.subr.bf16.mxu0 0
    %802 = vmatpush2.bf16.msra.mxu0 0
    %803 = vmatprep.subr.bf16.mxu0 0
    %804 = vmatpush2.bf16.msra.mxu0 0
    %805 = vmatprep.subr.bf16.mxu0 0
    %806 = vmatpush2.bf16.msra.mxu0 0
    %807 = vmatprep.subr.bf16.mxu0 0
    %808 = vmatpush2.bf16.msra.mxu0 0
    %809 = vmatprep.subr.bf16.mxu0 0
    %810 = vmatpush2.bf16.msra.mxu0 0
    %811 = vmatprep.subr.bf16.mxu0 0
    %812 = vmatpush2.bf16.msra.mxu0 0
    %813 = vmatprep.mubr.bf16.mxu0 0
    %814 = vmatmul.mubr.bf16.gmra.mxu0 %v779
    %v815 = vpop.f32.mrf.mxu0
    %v816 = vadd.f32 0.0, %v815
    %v817 = vpop.f32.mrf.mxu0
    %v818 = vpop.f32.mrf.mxu0
    %v819 = vadd.f32 0.0, %v818
    %v820 = vpop.f32.mrf.mxu0
    %821 = vdwg.mxu0
    %822 = vrot.lane.b32.xlu0 %v322, 112
    %v823 = vpop.permute.xlu0 %822
    %824 = vrot.lane.b32.xlu0 %v324, 112
    %v825 = vpop.permute.xlu0 %824
    %v827 = vsel %vm328, %v823, 0
    %v830 = vsel %vm328, %v825, 0
    %832 = vmatprep.subr.bf16.mxu0 0
    %833 = vmatpush1.bf16.xpose.msra.mxu0 0
    %834 = vmatprep.subr.bf16.mxu0 0
    %835 = vmatpush1.bf16.xpose.msra.mxu0 0
    %836 = vmatprep.subr.bf16.mxu0 0
    %837 = vmatpush1.bf16.xpose.msra.mxu0 0
    %838 = vmatprep.subr.bf16.mxu0 0
    %839 = vmatpush1.bf16.xpose.msra.mxu0 0
    %840 = vmatprep.subr.bf16.mxu0 0
    %841 = vmatpush1.bf16.xpose.msra.mxu0 0
    %842 = vmatprep.subr.bf16.mxu0 0
    %843 = vmatpush1.bf16.xpose.msra.mxu0 0
    %844 = vmatprep.subr.bf16.mxu0 0
    %845 = vmatpush1.bf16.xpose.msra.mxu0 0
    %846 = vmatprep.subr.bf16.mxu0 0
    %847 = vmatpush1.bf16.xpose.msra.mxu0 %v830
    %848 = vmatprep.subr.bf16.mxu0 0
    %849 = vmatpush2.bf16.xpose.msra.mxu0 0
    %850 = vmatprep.subr.bf16.mxu0 0
    %851 = vmatpush2.bf16.xpose.msra.mxu0 0
    %852 = vmatprep.subr.bf16.mxu0 0
    %853 = vmatpush2.bf16.xpose.msra.mxu0 0
    %854 = vmatprep.subr.bf16.mxu0 0
    %855 = vmatpush2.bf16.xpose.msra.mxu0 0
    %856 = vmatprep.subr.bf16.mxu0 0
    %857 = vmatpush2.bf16.xpose.msra.mxu0 0
    %858 = vmatprep.subr.bf16.mxu0 0
    %859 = vmatpush2.bf16.xpose.msra.mxu0 0
    %860 = vmatprep.subr.bf16.mxu0 0
    %861 = vmatpush2.bf16.xpose.msra.mxu0 0
    %862 = vmatprep.subr.bf16.mxu0 0
    %863 = vmatpush2.bf16.xpose.msra.mxu0 0
    %864 = vmatprep.mubr.bf16.mxu0 0
    %865 = vmatmul.mubr.bf16.gmra.mxu0 %v827
    %v866 = vpop.f32.mrf.mxu0
    %v867 = vadd.f32 0.0, %v866
    %v868 = vpop.f32.mrf.mxu0
    %v869 = vpop.f32.mrf.mxu0
    %v870 = vadd.f32 0.0, %v869
    %v871 = vpop.f32.mrf.mxu0
    %872 = vdwg.mxu0
    %873 = vrot.lane.b32.xlu0 %v323, 112
    %v874 = vpop.permute.xlu0 %873
    %875 = vrot.lane.b32.xlu0 %v325, 112
    %v876 = vpop.permute.xlu0 %875
    %v878 = vsel %vm328, %v874, 0
    %v881 = vsel %vm328, %v876, 0
    %883 = vmatprep.subr.bf16.mxu0 0
    %884 = vmatpush1.bf16.xpose.msra.mxu0 0
    %885 = vmatprep.subr.bf16.mxu0 0
    %886 = vmatpush1.bf16.xpose.msra.mxu0 0
    %887 = vmatprep.subr.bf16.mxu0 0
    %888 = vmatpush1.bf16.xpose.msra.mxu0 0
    %889 = vmatprep.subr.bf16.mxu0 0
    %890 = vmatpush1.bf16.xpose.msra.mxu0 0
    %891 = vmatprep.subr.bf16.mxu0 0
    %892 = vmatpush1.bf16.xpose.msra.mxu0 0
    %893 = vmatprep.subr.bf16.mxu0 0
    %894 = vmatpush1.bf16.xpose.msra.mxu0 0
    %895 = vmatprep.subr.bf16.mxu0 0
    %896 = vmatpush1.bf16.xpose.msra.mxu0 0
    %897 = vmatprep.subr.bf16.mxu0 0
    %898 = vmatpush1.bf16.xpose.msra.mxu0 %v881
    %899 = vmatprep.subr.bf16.mxu0 0
    %900 = vmatpush2.bf16.xpose.msra.mxu0 0
    %901 = vmatprep.subr.bf16.mxu0 0
    %902 = vmatpush2.bf16.xpose.msra.mxu0 0
    %903 = vmatprep.subr.bf16.mxu0 0
    %904 = vmatpush2.bf16.xpose.msra.mxu0 0
    %905 = vmatprep.subr.bf16.mxu0 0
    %906 = vmatpush2.bf16.xpose.msra.mxu0 0
    %907 = vmatprep.subr.bf16.mxu0 0
    %908 = vmatpush2.bf16.xpose.msra.mxu0 0
    %909 = vmatprep.subr.bf16.mxu0 0
    %910 = vmatpush2.bf16.xpose.msra.mxu0 0
    %911 = vmatprep.subr.bf16.mxu0 0
    %912 = vmatpush2.bf16.xpose.msra.mxu0 0
    %913 = vmatprep.subr.bf16.mxu0 0
    %914 = vmatpush2.bf16.xpose.msra.mxu0 0
    %915 = vmatprep.mubr.bf16.mxu0 0
    %916 = vmatmul.mubr.bf16.gmra.mxu0 %v878
    %v917 = vpop.f32.mrf.mxu0
    %v918 = vadd.f32 0.0, %v917
    %v919 = vpop.f32.mrf.mxu0
    %v920 = vpop.f32.mrf.mxu0
    %v921 = vadd.f32 0.0, %v920
    %v922 = vpop.f32.mrf.mxu0
    %923 = vdwg.mxu0
    %v924 = vmul.f32 %v867, 0.35355338
    %v925 = vmul.f32 %v870, 0.35355338
    %v926 = vmul.f32 %v918, 0.35355338
    %v927 = vmul.f32 %v921, 0.35355338
    %v928 = vadd.f32 %v924, %v318
    %v929 = vadd.f32 %v925, %v319
    %v930 = vadd.f32 %v926, %v320
    %v931 = vadd.f32 %v927, %v321
    %v932 = vsel %vm431, %v928, -inf
    %933 = vmax.xlane.f32.xlu0 %v932
    %v934 = vpop.xlane.xlu0 %933
    %v935 = vsel %vm431, %v929, -inf
    %936 = vmax.xlane.f32.xlu0 %v935
    %v937 = vpop.xlane.xlu0 %936
    %v938 = vsel %vm431, %v930, -inf
    %939 = vmax.xlane.f32.xlu0 %v938
    %v940 = vpop.xlane.xlu0 %939
    %v941 = vsel %vm431, %v931, -inf
    %942 = vmax.xlane.f32.xlu0 %v941
    %v943 = vpop.xlane.xlu0 %942
    %v944 = vsub.f32 %v928, %v934
    %v945 = vsub.f32 %v929, %v937
    %v946 = vsub.f32 %v930, %v940
    %v947 = vsub.f32 %v931, %v943
    %v948 = vmul.f32 %v944, 1.442695
    %v949 = vpow.pop %v948
    %v950 = vmul.f32 %v945, 1.442695
    %v951 = vpow.pop %v950
    %v952 = vmul.f32 %v946, 1.442695
    %v953 = vpow.pop %v952
    %v954 = vmul.f32 %v947, 1.442695
    %v955 = vpow.pop %v954
    %v956 = vsel %vm431, %v949, 0.0
    %957 = vadd.xlane.f32.xlu0 %v956
    %v958 = vpop.xlane.xlu0 %957
    %v959 = vsel %vm431, %v951, 0.0
    %960 = vadd.xlane.f32.xlu0 %v959
    %v961 = vpop.xlane.xlu0 %960
    %v962 = vsel %vm431, %v953, 0.0
    %963 = vadd.xlane.f32.xlu0 %v962
    %v964 = vpop.xlane.xlu0 %963
    %v965 = vsel %vm431, %v955, 0.0
    %966 = vadd.xlane.f32.xlu0 %v965
    %v967 = vpop.xlane.xlu0 %966
    %v968 = vrcp.pop %v958
    %v969 = vrcp.pop %v961
    %v970 = vrcp.pop %v964
    %v971 = vrcp.pop %v967
    %v972 = vmul.f32 %v949, %v968
    %v973 = vmul.f32 %v951, %v969
    %v974 = vmul.f32 %v953, %v970
    %v975 = vmul.f32 %v955, %v971
    %v976 = vpack.c.bf16 %v973, %v972
    %v977 = vpack.c.bf16 %v975, %v974
    %978 = vrot.lane.b32.xlu0 %v326, 112
    %v979 = vpop.permute.xlu0 %978
    %v982 = vsel %vm431, %v976, 0
    %984 = vmatprep.subr.bf16.mxu0 0
    %985 = vmatpush1.bf16.msra.mxu0 0
    %986 = vmatprep.subr.bf16.mxu0 0
    %987 = vmatpush1.bf16.msra.mxu0 0
    %988 = vmatprep.subr.bf16.mxu0 0
    %989 = vmatpush1.bf16.msra.mxu0 0
    %990 = vmatprep.subr.bf16.mxu0 0
    %991 = vmatpush1.bf16.msra.mxu0 0
    %992 = vmatprep.subr.bf16.mxu0 0
    %993 = vmatpush1.bf16.msra.mxu0 0
    %994 = vmatprep.subr.bf16.mxu0 0
    %995 = vmatpush1.bf16.msra.mxu0 0
    %996 = vmatprep.subr.bf16.mxu0 0
    %997 = vmatpush1.bf16.msra.mxu0 0
    %998 = vmatprep.subr.bf16.mxu0 0
    %999 = vmatpush1.bf16.msra.mxu0 %v979
    %1000 = vmatprep.subr.bf16.mxu0 0
    %1001 = vmatpush2.bf16.msra.mxu0 0
    %1002 = vmatprep.subr.bf16.mxu0 0
    %1003 = vmatpush2.bf16.msra.mxu0 0
    %1004 = vmatprep.subr.bf16.mxu0 0
    %1005 = vmatpush2.bf16.msra.mxu0 0
    %1006 = vmatprep.subr.bf16.mxu0 0
    %1007 = vmatpush2.bf16.msra.mxu0 0
    %1008 = vmatprep.subr.bf16.mxu0 0
    %1009 = vmatpush2.bf16.msra.mxu0 0
    %1010 = vmatprep.subr.bf16.mxu0 0
    %1011 = vmatpush2.bf16.msra.mxu0 0
    %1012 = vmatprep.subr.bf16.mxu0 0
    %1013 = vmatpush2.bf16.msra.mxu0 0
    %1014 = vmatprep.subr.bf16.mxu0 0
    %1015 = vmatpush2.bf16.msra.mxu0 0
    %1016 = vmatprep.mubr.bf16.mxu0 0
    %1017 = vmatmul.mubr.bf16.gmra.mxu0 %v982
    %v1018 = vpop.f32.mrf.mxu0
    %v1019 = vadd.f32 0.0, %v1018
    %v1020 = vpop.f32.mrf.mxu0
    %v1021 = vpop.f32.mrf.mxu0
    %v1022 = vadd.f32 0.0, %v1021
    %v1023 = vpop.f32.mrf.mxu0
    %1024 = vdwg.mxu0
    %1025 = vrot.lane.b32.xlu0 %v327, 112
    %v1026 = vpop.permute.xlu0 %1025
    %v1029 = vsel %vm431, %v977, 0
    %1031 = vmatprep.subr.bf16.mxu0 0
    %1032 = vmatpush1.bf16.msra.mxu0 0
    %1033 = vmatprep.subr.bf16.mxu0 0
    %1034 = vmatpush1.bf16.msra.mxu0 0
    %1035 = vmatprep.subr.bf16.mxu0 0
    %1036 = vmatpush1.bf16.msra.mxu0 0
    %1037 = vmatprep.subr.bf16.mxu0 0
    %1038 = vmatpush1.bf16.msra.mxu0 0
    %1039 = vmatprep.subr.bf16.mxu0 0
    %1040 = vmatpush1.bf16.msra.mxu0 0
    %1041 = vmatprep.subr.bf16.mxu0 0
    %1042 = vmatpush1.bf16.msra.mxu0 0
    %1043 = vmatprep.subr.bf16.mxu0 0
    %1044 = vmatpush1.bf16.msra.mxu0 0
    %1045 = vmatprep.subr.bf16.mxu0 0
    %1046 = vmatpush1.bf16.msra.mxu0 %v1026
    %1047 = vmatprep.subr.bf16.mxu0 0
    %1048 = vmatpush2.bf16.msra.mxu0 0
    %1049 = vmatprep.subr.bf16.mxu0 0
    %1050 = vmatpush2.bf16.msra.mxu0 0
    %1051 = vmatprep.subr.bf16.mxu0 0
    %1052 = vmatpush2.bf16.msra.mxu0 0
    %1053 = vmatprep.subr.bf16.mxu0 0
    %1054 = vmatpush2.bf16.msra.mxu0 0
    %1055 = vmatprep.subr.bf16.mxu0 0
    %1056 = vmatpush2.bf16.msra.mxu0 0
    %1057 = vmatprep.subr.bf16.mxu0 0
    %1058 = vmatpush2.bf16.msra.mxu0 0
    %1059 = vmatprep.subr.bf16.mxu0 0
    %1060 = vmatpush2.bf16.msra.mxu0 0
    %1061 = vmatprep.subr.bf16.mxu0 0
    %1062 = vmatpush2.bf16.msra.mxu0 0
    %1063 = vmatprep.mubr.bf16.mxu0 0
    %1064 = vmatmul.mubr.bf16.gmra.mxu0 %v1029
    %v1065 = vpop.f32.mrf.mxu0
    %v1066 = vadd.f32 0.0, %v1065
    %v1067 = vpop.f32.mrf.mxu0
    %v1068 = vpop.f32.mrf.mxu0
    %v1069 = vadd.f32 0.0, %v1068
    %v1070 = vpop.f32.mrf.mxu0
    %1071 = vdwg.mxu0
    %1072 = vrot.lane.b32.xlu0 %v322, 104
    %v1073 = vpop.permute.xlu0 %1072
    %1074 = vrot.lane.b32.xlu0 %v324, 104
    %v1075 = vpop.permute.xlu0 %1074
    %v1077 = vsel %vm328, %v1073, 0
    %v1080 = vsel %vm328, %v1075, 0
    %1082 = vmatprep.subr.bf16.mxu0 0
    %1083 = vmatpush1.bf16.xpose.msra.mxu0 0
    %1084 = vmatprep.subr.bf16.mxu0 0
    %1085 = vmatpush1.bf16.xpose.msra.mxu0 0
    %1086 = vmatprep.subr.bf16.mxu0 0
    %1087 = vmatpush1.bf16.xpose.msra.mxu0 0
    %1088 = vmatprep.subr.bf16.mxu0 0
    %1089 = vmatpush1.bf16.xpose.msra.mxu0 0
    %1090 = vmatprep.subr.bf16.mxu0 0
    %1091 = vmatpush1.bf16.xpose.msra.mxu0 0
    %1092 = vmatprep.subr.bf16.mxu0 0
    %1093 = vmatpush1.bf16.xpose.msra.mxu0 0
    %1094 = vmatprep.subr.bf16.mxu0 0
    %1095 = vmatpush1.bf16.xpose.msra.mxu0 0
    %1096 = vmatprep.subr.bf16.mxu0 0
    %1097 = vmatpush1.bf16.xpose.msra.mxu0 %v1080
    %1098 = vmatprep.subr.bf16.mxu0 0
    %1099 = vmatpush2.bf16.xpose.msra.mxu0 0
    %1100 = vmatprep.subr.bf16.mxu0 0
    %1101 = vmatpush2.bf16.xpose.msra.mxu0 0
    %1102 = vmatprep.subr.bf16.mxu0 0
    %1103 = vmatpush2.bf16.xpose.msra.mxu0 0
    %1104 = vmatprep.subr.bf16.mxu0 0
    %1105 = vmatpush2.bf16.xpose.msra.mxu0 0
    %1106 = vmatprep.subr.bf16.mxu0 0
    %1107 = vmatpush2.bf16.xpose.msra.mxu0 0
    %1108 = vmatprep.subr.bf16.mxu0 0
    %1109 = vmatpush2.bf16.xpose.msra.mxu0 0
    %1110 = vmatprep.subr.bf16.mxu0 0
    %1111 = vmatpush2.bf16.xpose.msra.mxu0 0
    %1112 = vmatprep.subr.bf16.mxu0 0
    %1113 = vmatpush2.bf16.xpose.msra.mxu0 0
    %1114 = vmatprep.mubr.bf16.mxu0 0
    %1115 = vmatmul.mubr.bf16.gmra.mxu0 %v1077
    %v1116 = vpop.f32.mrf.mxu0
    %v1117 = vadd.f32 0.0, %v1116
    %v1118 = vpop.f32.mrf.mxu0
    %v1119 = vpop.f32.mrf.mxu0
    %v1120 = vadd.f32 0.0, %v1119
    %v1121 = vpop.f32.mrf.mxu0
    %1122 = vdwg.mxu0
    %1123 = vrot.lane.b32.xlu0 %v323, 104
    %v1124 = vpop.permute.xlu0 %1123
    %1125 = vrot.lane.b32.xlu0 %v325, 104
    %v1126 = vpop.permute.xlu0 %1125
    %v1128 = vsel %vm328, %v1124, 0
    %v1131 = vsel %vm328, %v1126, 0
    %1133 = vmatprep.subr.bf16.mxu0 0
    %1134 = vmatpush1.bf16.xpose.msra.mxu0 0
    %1135 = vmatprep.subr.bf16.mxu0 0
    %1136 = vmatpush1.bf16.xpose.msra.mxu0 0
    %1137 = vmatprep.subr.bf16.mxu0 0
    %1138 = vmatpush1.bf16.xpose.msra.mxu0 0
    %1139 = vmatprep.subr.bf16.mxu0 0
    %1140 = vmatpush1.bf16.xpose.msra.mxu0 0
    %1141 = vmatprep.subr.bf16.mxu0 0
    %1142 = vmatpush1.bf16.xpose.msra.mxu0 0
    %1143 = vmatprep.subr.bf16.mxu0 0
    %1144 = vmatpush1.bf16.xpose.msra.mxu0 0
    %1145 = vmatprep.subr.bf16.mxu0 0
    %1146 = vmatpush1.bf16.xpose.msra.mxu0 0
    %1147 = vmatprep.subr.bf16.mxu0 0
    %1148 = vmatpush1.bf16.xpose.msra.mxu0 %v1131
    %1149 = vmatprep.subr.bf16.mxu0 0
    %1150 = vmatpush2.bf16.xpose.msra.mxu0 0
    %1151 = vmatprep.subr.bf16.mxu0 0
    %1152 = vmatpush2.bf16.xpose.msra.mxu0 0
    %1153 = vmatprep.subr.bf16.mxu0 0
    %1154 = vmatpush2.bf16.xpose.msra.mxu0 0
    %1155 = vmatprep.subr.bf16.mxu0 0
    %1156 = vmatpush2.bf16.xpose.msra.mxu0 0
    %1157 = vmatprep.subr.bf16.mxu0 0
    %1158 = vmatpush2.bf16.xpose.msra.mxu0 0
    %1159 = vmatprep.subr.bf16.mxu0 0
    %1160 = vmatpush2.bf16.xpose.msra.mxu0 0
    %1161 = vmatprep.subr.bf16.mxu0 0
    %1162 = vmatpush2.bf16.xpose.msra.mxu0 0
    %1163 = vmatprep.subr.bf16.mxu0 0
    %1164 = vmatpush2.bf16.xpose.msra.mxu0 0
    %1165 = vmatprep.mubr.bf16.mxu0 0
    %1166 = vmatmul.mubr.bf16.gmra.mxu0 %v1128
    %v1167 = vpop.f32.mrf.mxu0
    %v1168 = vadd.f32 0.0, %v1167
    %v1169 = vpop.f32.mrf.mxu0
    %v1170 = vpop.f32.mrf.mxu0
    %v1171 = vadd.f32 0.0, %v1170
    %v1172 = vpop.f32.mrf.mxu0
    %1173 = vdwg.mxu0
    %v1174 = vmul.f32 %v1117, 0.35355338
    %v1175 = vmul.f32 %v1120, 0.35355338
    %v1176 = vmul.f32 %v1168, 0.35355338
    %v1177 = vmul.f32 %v1171, 0.35355338
    %v1178 = vadd.f32 %v1174, %v318
    %v1179 = vadd.f32 %v1175, %v319
    %v1180 = vadd.f32 %v1176, %v320
    %v1181 = vadd.f32 %v1177, %v321
    %v1182 = vsel %vm431, %v1178, -inf
    %1183 = vmax.xlane.f32.xlu0 %v1182
    %v1184 = vpop.xlane.xlu0 %1183
    %v1185 = vsel %vm431, %v1179, -inf
    %1186 = vmax.xlane.f32.xlu0 %v1185
    %v1187 = vpop.xlane.xlu0 %1186
    %v1188 = vsel %vm431, %v1180, -inf
    %1189 = vmax.xlane.f32.xlu0 %v1188
    %v1190 = vpop.xlane.xlu0 %1189
    %v1191 = vsel %vm431, %v1181, -inf
    %1192 = vmax.xlane.f32.xlu0 %v1191
    %v1193 = vpop.xlane.xlu0 %1192
    %v1194 = vsub.f32 %v1178, %v1184
    %v1195 = vsub.f32 %v1179, %v1187
    %v1196 = vsub.f32 %v1180, %v1190
    %v1197 = vsub.f32 %v1181, %v1193
    %v1198 = vmul.f32 %v1194, 1.442695
    %v1199 = vpow.pop %v1198
    %v1200 = vmul.f32 %v1195, 1.442695
    %v1201 = vpow.pop %v1200
    %v1202 = vmul.f32 %v1196, 1.442695
    %v1203 = vpow.pop %v1202
    %v1204 = vmul.f32 %v1197, 1.442695
    %v1205 = vpow.pop %v1204
    %v1206 = vsel %vm431, %v1199, 0.0
    %1207 = vadd.xlane.f32.xlu0 %v1206
    %v1208 = vpop.xlane.xlu0 %1207
    %v1209 = vsel %vm431, %v1201, 0.0
    %1210 = vadd.xlane.f32.xlu0 %v1209
    %v1211 = vpop.xlane.xlu0 %1210
    %v1212 = vsel %vm431, %v1203, 0.0
    %1213 = vadd.xlane.f32.xlu0 %v1212
    %v1214 = vpop.xlane.xlu0 %1213
    %v1215 = vsel %vm431, %v1205, 0.0
    %1216 = vadd.xlane.f32.xlu0 %v1215
    %v1217 = vpop.xlane.xlu0 %1216
    %v1218 = vrcp.pop %v1208
    %v1219 = vrcp.pop %v1211
    %v1220 = vrcp.pop %v1214
    %v1221 = vrcp.pop %v1217
    %v1222 = vmul.f32 %v1199, %v1218
    %v1223 = vmul.f32 %v1201, %v1219
    %v1224 = vmul.f32 %v1203, %v1220
    %v1225 = vmul.f32 %v1205, %v1221
    %v1226 = vpack.c.bf16 %v1223, %v1222
    %v1227 = vpack.c.bf16 %v1225, %v1224
    %1228 = vrot.lane.b32.xlu0 %v326, 104
    %v1229 = vpop.permute.xlu0 %1228
    %v1232 = vsel %vm431, %v1226, 0
    %1234 = vmatprep.subr.bf16.mxu0 0
    %1235 = vmatpush1.bf16.msra.mxu0 0
    %1236 = vmatprep.subr.bf16.mxu0 0
    %1237 = vmatpush1.bf16.msra.mxu0 0
    %1238 = vmatprep.subr.bf16.mxu0 0
    %1239 = vmatpush1.bf16.msra.mxu0 0
    %1240 = vmatprep.subr.bf16.mxu0 0
    %1241 = vmatpush1.bf16.msra.mxu0 0
    %1242 = vmatprep.subr.bf16.mxu0 0
    %1243 = vmatpush1.bf16.msra.mxu0 0
    %1244 = vmatprep.subr.bf16.mxu0 0
    %1245 = vmatpush1.bf16.msra.mxu0 0
    %1246 = vmatprep.subr.bf16.mxu0 0
    %1247 = vmatpush1.bf16.msra.mxu0 0
    %1248 = vmatprep.subr.bf16.mxu0 0
    %1249 = vmatpush1.bf16.msra.mxu0 %v1229
    %1250 = vmatprep.subr.bf16.mxu0 0
    %1251 = vmatpush2.bf16.msra.mxu0 0
    %1252 = vmatprep.subr.bf16.mxu0 0
    %1253 = vmatpush2.bf16.msra.mxu0 0
    %1254 = vmatprep.subr.bf16.mxu0 0
    %1255 = vmatpush2.bf16.msra.mxu0 0
    %1256 = vmatprep.subr.bf16.mxu0 0
    %1257 = vmatpush2.bf16.msra.mxu0 0
    %1258 = vmatprep.subr.bf16.mxu0 0
    %1259 = vmatpush2.bf16.msra.mxu0 0
    %1260 = vmatprep.subr.bf16.mxu0 0
    %1261 = vmatpush2.bf16.msra.mxu0 0
    %1262 = vmatprep.subr.bf16.mxu0 0
    %1263 = vmatpush2.bf16.msra.mxu0 0
    %1264 = vmatprep.subr.bf16.mxu0 0
    %1265 = vmatpush2.bf16.msra.mxu0 0
    %1266 = vmatprep.mubr.bf16.mxu0 0
    %1267 = vmatmul.mubr.bf16.gmra.mxu0 %v1232
    %v1268 = vpop.f32.mrf.mxu0
    %v1269 = vadd.f32 0.0, %v1268
    %v1270 = vpop.f32.mrf.mxu0
    %v1271 = vpop.f32.mrf.mxu0
    %v1272 = vadd.f32 0.0, %v1271
    %v1273 = vpop.f32.mrf.mxu0
    %1274 = vdwg.mxu0
    %1275 = vrot.lane.b32.xlu0 %v327, 104
    %v1276 = vpop.permute.xlu0 %1275
    %v1279 = vsel %vm431, %v1227, 0
    %1281 = vmatprep.subr.bf16.mxu0 0
    %1282 = vmatpush1.bf16.msra.mxu0 0
    %1283 = vmatprep.subr.bf16.mxu0 0
    %1284 = vmatpush1.bf16.msra.mxu0 0
    %1285 = vmatprep.subr.bf16.mxu0 0
    %1286 = vmatpush1.bf16.msra.mxu0 0
    %1287 = vmatprep.subr.bf16.mxu0 0
    %1288 = vmatpush1.bf16.msra.mxu0 0
    %1289 = vmatprep.subr.bf16.mxu0 0
    %1290 = vmatpush1.bf16.msra.mxu0 0
    %1291 = vmatprep.subr.bf16.mxu0 0
    %1292 = vmatpush1.bf16.msra.mxu0 0
    %1293 = vmatprep.subr.bf16.mxu0 0
    %1294 = vmatpush1.bf16.msra.mxu0 0
    %1295 = vmatprep.subr.bf16.mxu0 0
    %1296 = vmatpush1.bf16.msra.mxu0 %v1276
    %1297 = vmatprep.subr.bf16.mxu0 0
    %1298 = vmatpush2.bf16.msra.mxu0 0
    %1299 = vmatprep.subr.bf16.mxu0 0
    %1300 = vmatpush2.bf16.msra.mxu0 0
    %1301 = vmatprep.subr.bf16.mxu0 0
    %1302 = vmatpush2.bf16.msra.mxu0 0
    %1303 = vmatprep.subr.bf16.mxu0 0
    %1304 = vmatpush2.bf16.msra.mxu0 0
    %1305 = vmatprep.subr.bf16.mxu0 0
    %1306 = vmatpush2.bf16.msra.mxu0 0
    %1307 = vmatprep.subr.bf16.mxu0 0
    %1308 = vmatpush2.bf16.msra.mxu0 0
    %1309 = vmatprep.subr.bf16.mxu0 0
    %1310 = vmatpush2.bf16.msra.mxu0 0
    %1311 = vmatprep.subr.bf16.mxu0 0
    %1312 = vmatpush2.bf16.msra.mxu0 0
    %1313 = vmatprep.mubr.bf16.mxu0 0
    %1314 = vmatmul.mubr.bf16.gmra.mxu0 %v1279
    %v1315 = vpop.f32.mrf.mxu0
    %v1316 = vadd.f32 0.0, %v1315
    %v1317 = vpop.f32.mrf.mxu0
    %v1318 = vpop.f32.mrf.mxu0
    %v1319 = vadd.f32 0.0, %v1318
    %v1320 = vpop.f32.mrf.mxu0
    %1321 = vdwg.mxu0
    %1326 = vrot.lane.b32.xlu0 %v768, 8
    %v1327 = vpop.permute.xlu0 %1326
    %1328 = vrot.lane.b32.xlu0 %v771, 8
    %v1329 = vpop.permute.xlu0 %1328
    %1330 = vrot.lane.b32.xlu0 %v816, 8
    %v1331 = vpop.permute.xlu0 %1330
    %1332 = vrot.lane.b32.xlu0 %v819, 8
    %v1333 = vpop.permute.xlu0 %1332
    %1342 = vrot.lane.b32.xlu0 %v1019, 16
    %v1343 = vpop.permute.xlu0 %1342
    %1344 = vrot.lane.b32.xlu0 %v1022, 16
    %v1345 = vpop.permute.xlu0 %1344
    %1346 = vrot.lane.b32.xlu0 %v1066, 16
    %v1347 = vpop.permute.xlu0 %1346
    %1348 = vrot.lane.b32.xlu0 %v1069, 16
    %v1349 = vpop.permute.xlu0 %1348
    %1358 = vrot.lane.b32.xlu0 %v1269, 24
    %v1359 = vpop.permute.xlu0 %1358
    %1360 = vrot.lane.b32.xlu0 %v1272, 24
    %v1361 = vpop.permute.xlu0 %1360
    %1362 = vrot.lane.b32.xlu0 %v1316, 24
    %v1363 = vpop.permute.xlu0 %1362
    %1364 = vrot.lane.b32.xlu0 %v1319, 24
    %v1365 = vpop.permute.xlu0 %1364
    %v1370 = vsel %vm328, %v516, %v1327
    %v1371 = vsel %vm328, %v519, %v1329
    %v1372 = vsel %vm328, %v560, %v1331
    %v1373 = vsel %vm328, %v563, %v1333
    %v1374 = vsel %vm431, %v1370, %v1343
    %v1375 = vsel %vm431, %v1371, %v1345
    %v1376 = vsel %vm431, %v1372, %v1347
    %v1377 = vsel %vm431, %v1373, %v1349
    %vm1378 = vcmask 195584
    %v1379 = vsel %vm1378, %v1374, %v1359
    %v1380 = vsel %vm1378, %v1375, %v1361
    %v1381 = vsel %vm1378, %v1376, %v1363
    %v1382 = vsel %vm1378, %v1377, %v1365
    %v1383 = vpack.c.bf16 %v1380, %v1379
    %v1384 = vpack.c.bf16 %v1382, %v1381
    %1385 = vrot.lane.b32.xlu0 %v130, 32
    %v1386 = vpop.permute.xlu0 %1385
    %1387 = vrot.lane.b32.xlu0 %v131, 32
    %v1388 = vpop.permute.xlu0 %1387
    %1391 = vrot.lane.b32.xlu0 %v120, 32
    %v1392 = vpop.permute.xlu0 %1391
    %v1395 = vsel %vm134, %v1383, 0
    %v1398 = vsel %vm134, %v1384, 0
    %1400 = vmatprep.subr.bf16.mxu0 0
    %1401 = vmatpush1.bf16.msra.mxu0 0
    %1402 = vmatprep.subr.bf16.mxu0 0
    %1403 = vmatpush1.bf16.msra.mxu0 0
    %1404 = vmatprep.subr.bf16.mxu0 0
    %1405 = vmatpush1.bf16.msra.mxu0 0
    %1406 = vmatprep.subr.bf16.mxu0 0
    %1407 = vmatpush1.bf16.msra.mxu0 0
    %1408 = vmatprep.subr.bf16.mxu0 0
    %1409 = vmatpush1.bf16.msra.mxu0 0
    %1410 = vmatprep.subr.bf16.mxu0 0
    %1411 = vmatpush1.bf16.msra.mxu0 0
    %1412 = vmatprep.subr.bf16.mxu0 0
    %1413 = vmatpush1.bf16.msra.mxu0 %v1388
    %1414 = vmatprep.subr.bf16.mxu0 0
    %1415 = vmatpush1.bf16.msra.mxu0 %v1386
    %1416 = vmatprep.subr.bf16.mxu0 0
    %1417 = vmatpush2.bf16.msra.mxu0 0
    %1418 = vmatprep.subr.bf16.mxu0 0
    %1419 = vmatpush2.bf16.msra.mxu0 0
    %1420 = vmatprep.subr.bf16.mxu0 0
    %1421 = vmatpush2.bf16.msra.mxu0 0
    %1422 = vmatprep.subr.bf16.mxu0 0
    %1423 = vmatpush2.bf16.msra.mxu0 0
    %1424 = vmatprep.subr.bf16.mxu0 0
    %1425 = vmatpush2.bf16.msra.mxu0 0
    %1426 = vmatprep.subr.bf16.mxu0 0
    %1427 = vmatpush2.bf16.msra.mxu0 0
    %1428 = vmatprep.subr.bf16.mxu0 0
    %1429 = vmatpush2.bf16.msra.mxu0 0
    %1430 = vmatprep.subr.bf16.mxu0 0
    %1431 = vmatpush2.bf16.msra.mxu0 0
    %1432 = vmatprep.mubr.bf16.mxu0 0
    %1433 = vmatmul.mubr.bf16.gmra.mxu0 %v1395
    %v1434 = vpop.f32.mrf.mxu0
    %v1435 = vadd.f32 %v1392, %v1434
    %v1436 = vpop.f32.mrf.mxu0
    %v1437 = vpop.f32.mrf.mxu0
    %v1438 = vadd.f32 %v1392, %v1437
    %v1439 = vpop.f32.mrf.mxu0
    %1440 = vmatprep.mubr.bf16.mxu0 0
    %1441 = vmatmul.mubr.bf16.gmra.mxu0 %v1398
    %v1442 = vpop.f32.mrf.mxu0
    %v1443 = vadd.f32 %v1392, %v1442
    %v1444 = vpop.f32.mrf.mxu0
    %v1445 = vpop.f32.mrf.mxu0
    %v1446 = vadd.f32 %v1392, %v1445
    %v1447 = vpop.f32.mrf.mxu0
    %1448 = vdwg.mxu0
    %1449 = vst.msk [vmem:[#allocation11] sm:$0xff] %vm134, %v1435
    %1450 = vst.msk [vmem:[#allocation11 + $0x8] sm:$0xff] %vm134, %v1438
    %1451 = vst.msk [vmem:[#allocation11 + $0x10] sm:$0xff] %vm134, %v1443
    %1452 = vst.msk [vmem:[#allocation11 + $0x18] sm:$0xff] %vm134, %v1446
    // Predicated region
    $region46: #{tpu_custom_call.1} parent=1 // pred_check
      _
    $region47: #{tpu_custom_call.1} parent=1 // pred_check_branch
      %1454 = sbr.rel (0) target = $region49
    $region48: #{tpu_custom_call.1} parent=1 // pred_region
      %s1456 = ssub.s32 512, 512
      %1457 = vsyncadd [#allocation4], %s1456
      %s1458 = sshll.u32 [#allocation11], 4
      %s1459 = int_to_ptr.vmem [resolvable:$true] %s1458
      %1464 = dma.vmem_to_hbm [thread:$0]  %s1459, 512, %s6, [#allocation4], 128, 128, 8
    $region49: #{tpu_custom_call.1} parent=1 // pred_fallthru
      _
    // Predicated region
    $region50: #{tpu_custom_call.1} parent=1 // pred_check
      _
    $region51: #{tpu_custom_call.1} parent=1 // pred_check_branch
      %1466 = sbr.rel (0) target = $region53
    $region52: #{tpu_custom_call.1} parent=1 // pred_region
      %1467 = dma.done [#allocation4], 512
    $region53: #{tpu_custom_call.1} parent=1 // pred_fallthru
      _
    %1468 = vsyncpa [#allocation3], 1
    %1469 = vsyncpa [#allocation6], 1
    %1470 = vsyncpa [#allocation9], 1
    %1471 = vsyncpa [#allocation4], 1

</llo_original>
